<compile_context>
chip_gen: v6e
topology: v6e:2x2x1
jax: 0.10.0
libtpu: 0.0.40
codegen_flags: <defaults>
</compile_context>

<pallas_src>
import jax
import jax.numpy as jnp
from jax import lax
from jax.experimental import pallas as pl
from jax.experimental.pallas import tpu as pltpu


def _round_up(x, m):
    return (x + m - 1) // m * m


def _mlp_kernel(z_ref, w1_ref, b1_ref, w2_ref, b2_ref, w3_ref, b3_ref,
                w4t_ref, b4_ref, o_ref):
    f32 = jnp.float32
    bf16 = jnp.bfloat16
    idim = z_ref.shape[1]
    odim = o_ref.shape[1]

    # ---- Layer 1: Linear(idim -> hdim) + ReLU --------------------------------
    if idim <= 8:
        # K is tiny: an MXU pass would be nearly empty. Do `idim` broadcast FMAs
        # on the (otherwise idle) VPU instead, all in f32.
        z = z_ref[...].astype(f32)               # (TB, idim)
        w1 = w1_ref[...].astype(f32)             # (idim, hdim)
        h = b1_ref[...]                          # (1, hdim) f32
        for k in range(idim):
            h = h + z[:, k:k + 1] * w1[k:k + 1, :]
    else:
        h = jnp.dot(z_ref[...].astype(bf16), w1_ref[...],
                    preferred_element_type=f32) + b1_ref[...]
    h = jnp.maximum(h, 0.0)

    # ---- Layers 2 & 3: bf16 MXU matmuls, f32 accumulation, f32 epilogue ------
    h = jnp.dot(h.astype(bf16), w2_ref[...], preferred_element_type=f32)
    h = jnp.maximum(h + b2_ref[...], 0.0)
    h = jnp.dot(h.astype(bf16), w3_ref[...], preferred_element_type=f32)
    h = jnp.maximum(h + b3_ref[...], 0.0)

    # ---- Layer 4: Linear(hdim -> odim), no activation -------------------------
    b4 = b4_ref[...]                             # (1, odim) f32
    if odim <= 8:
        # N is tiny: lane-reduce against the lane-dense rows of W4^T (XLU slot),
        # avoiding a lane-sparse (hdim, odim) MXU operand.
        w4t = w4t_ref[...].astype(f32)           # (odim, hdim)
        for j in range(odim):
            col = jnp.sum(h * w4t[j:j + 1, :], axis=-1, keepdims=True)  # (TB, 1)
            o_ref[:, j:j + 1] = (col + b4[:, j:j + 1]).astype(o_ref.dtype)
    else:
        out = lax.dot_general(h.astype(bf16), w4t_ref[...],
                              (((1,), (1,)), ((), ())),
                              preferred_element_type=f32) + b4
        o_ref[...] = out.astype(o_ref.dtype)


@jax.jit
def generator_forward(z, params):
    """Fused Generator forward. z: (B, idim) float32. Returns (B, odim) float32."""
    (w1, b1), (w2, b2), (w3, b3), (w4t, b4) = params
    B, idim = z.shape
    hdim = w1.shape[1]
    odim = w4t.shape[0]

    # Batch tile: fill the MXU M dimension (up to 512 rows) and amortize per-step
    # overhead, but shrink for tiny batches. Always a multiple of 8 sublanes.
    TB = min(512, _round_up(B, 8))
    B_pad = _round_up(B, TB)
    if B_pad != B:
        z = jnp.pad(z, ((0, B_pad - B), (0, 0)))
    grid = (B_pad // TB,)

    batch_map = lambda i: (i, 0)
    const_map = lambda i: (0, 0)   # weights/biases stay VMEM-resident across steps

    in_specs = [
        pl.BlockSpec((TB, idim), batch_map),
        pl.BlockSpec((idim, hdim), const_map), pl.BlockSpec((1, hdim), const_map),
        pl.BlockSpec((hdim, hdim), const_map), pl.BlockSpec((1, hdim), const_map),
        pl.BlockSpec((hdim, hdim), const_map), pl.BlockSpec((1, hdim), const_map),
        pl.BlockSpec((odim, hdim), const_map), pl.BlockSpec((1, odim), const_map),
    ]
    out_specs = pl.BlockSpec((TB, odim), batch_map)

    # Cost estimate (advisory, helps XLA schedule around the custom call).
    weight_bytes = sum(int(a.size) * a.dtype.itemsize
                       for pair in ((w1, b1), (w2, b2), (w3, b3), (w4t, b4))
                       for a in pair)
    flops = 2 * B_pad * (idim * hdim + 2 * hdim * hdim + hdim * odim)
    bytes_accessed = int(weight_bytes + B_pad * idim * 4 + B_pad * odim * 4)

    # VMEM budget: resident weights (x2 for buffering), double-buffered z/out tiles,
    # plus a generous allowance for (TB, hdim) f32/bf16 intermediates.  Clamp well
    # below v7x's 64 MiB / TensorCore.
    vmem_need = (2 * weight_bytes
                 + 2 * (TB * idim + TB * odim) * 4
                 + 8 * TB * hdim * 4)
    vmem_limit = int(min(max(2 * vmem_need, 16 << 20), 48 << 20))

    out = pl.pallas_call(
        _mlp_kernel,
        out_shape=jax.ShapeDtypeStruct((B_pad, odim), jnp.float32),
        grid=grid,
        in_specs=in_specs,
        out_specs=out_specs,
        compiler_params=pltpu.CompilerParams(
            dimension_semantics=("parallel",),
            vmem_limit_bytes=vmem_limit),
        cost_estimate=pl.CostEstimate(flops=int(flops), transcendentals=0,
                                      bytes_accessed=bytes_accessed),
    )(z, w1, b1, w2, b2, w3, b3, w4t, b4)

    return out[:B] if B_pad != B else out


def init_generator_params(key, idim=2, hdim=512, odim=2):
    """Deterministic init mimicking nn.Linear default (uniform +-1/sqrt(fan_in)).

    Kernel-ready layout: weights (in_features, out_features) in bfloat16, except the
    last layer stored transposed as (odim, hdim).  Biases (1, out_features) float32.
    """
    dims = [(idim, hdim), (hdim, hdim), (hdim, hdim), (hdim, odim)]
    params = []
    for li, (fan_in, fan_out) in enumerate(dims):
        key, kw, kb = jax.random.split(key, 3)
        bound = 1.0 / (float(fan_in) ** 0.5)
        w = jax.random.uniform(kw, (fan_in, fan_out), jnp.float32, -bound, bound)
        b = jax.random.uniform(kb, (1, fan_out), jnp.float32, -bound, bound)
        if li == len(dims) - 1:
            w = w.T  # store W4^T: rows are lane-dense inside the kernel
        params.append((w.astype(jnp.bfloat16), b.astype(jnp.float32)))
    return tuple(params)


def _reference_forward(z, params):
    """Pure-JAX reference mirroring the kernel's dtypes (bf16 weights, f32 accum)."""
    (w1, b1), (w2, b2), (w3, b3), (w4t, b4) = params
    f32 = jnp.float32
    h = jnp.maximum(jnp.dot(z.astype(f32), w1.astype(f32)) + b1, 0.0)
    h = jnp.maximum(
        jnp.dot(h.astype(jnp.bfloat16), w2, preferred_element_type=f32) + b2, 0.0)
    h = jnp.maximum(
        jnp.dot(h.astype(jnp.bfloat16), w3, preferred_element_type=f32) + b3, 0.0)
    return jnp.dot(h, w4t.T.astype(f32)) + b4


if __name__ == "__main__":
    key = jax.random.PRNGKey(0)
    kp, kz1, kz2 = jax.random.split(key, 3)

    idim, hdim, odim = 2, 512, 2
    params = init_generator_params(kp, idim=idim, hdim=hdim, odim=odim)

    # Small batch: single grid step, batch padded 6 -> 8.
    z_small = jax.random.normal(kz1, (6, idim), dtype=jnp.float32)
    out_small = jax.block_until_ready(generator_forward(z_small, params))
    ref_small = _reference_forward(z_small, params)
    assert out_small.shape == (6, odim), out_small.shape
    assert jnp.allclose(out_small, ref_small, atol=1e-2, rtol=1e-2), "small-batch mismatch"

    # Larger batch: exercises multi-step grid (TB=512, grid=(3,)) and tail padding.
    z_big = jax.random.normal(kz2, (1030, idim), dtype=jnp.float32)
    out_big = jax.block_until_ready(generator_forward(z_big, params))
    ref_big = _reference_forward(z_big, params)
    assert out_big.shape == (1030, odim), out_big.shape
    assert jnp.allclose(out_big, ref_big, atol=1e-2, rtol=1e-2), "big-batch mismatch"

    print("KERNEL_OK")
</pallas_src>

<mosaic_0001>
module attributes {stable_mosaic.version = 11 : i64} {
  func.func @_mlp_kernel(%arg0: i32, %arg1: memref<8x2xf32, #tpu.memory_space<vmem>>, %arg2: memref<2x512xbf16, #tpu.memory_space<vmem>>, %arg3: memref<1x512xf32, #tpu.memory_space<vmem>>, %arg4: memref<512x512xbf16, #tpu.memory_space<vmem>>, %arg5: memref<1x512xf32, #tpu.memory_space<vmem>>, %arg6: memref<512x512xbf16, #tpu.memory_space<vmem>>, %arg7: memref<1x512xf32, #tpu.memory_space<vmem>>, %arg8: memref<2x512xbf16, #tpu.memory_space<vmem>>, %arg9: memref<1x2xf32, #tpu.memory_space<vmem>>, %arg10: memref<8x2xf32, #tpu.memory_space<vmem>>) attributes {dimension_semantics = [#tpu.dimension_semantics<parallel>], iteration_bounds = array<i64: 1>, scalar_prefetch = 0 : i64, scratch_operands = 0 : i64, tpu.core_type = #tpu.core_type<tc>, window_params = [{transform_indices = @transform_0, window_bounds = array<i64: 8, 2>}, {pipeline_mode = #tpu.pipeline_mode<synchronous>, transform_indices = @transform_1, window_bounds = array<i64: 2, 512>}, {pipeline_mode = #tpu.pipeline_mode<synchronous>, transform_indices = @transform_2, window_bounds = array<i64: 1, 512>}, {pipeline_mode = #tpu.pipeline_mode<synchronous>, transform_indices = @transform_3, window_bounds = array<i64: 512, 512>}, {pipeline_mode = #tpu.pipeline_mode<synchronous>, transform_indices = @transform_4, window_bounds = array<i64: 1, 512>}, {pipeline_mode = #tpu.pipeline_mode<synchronous>, transform_indices = @transform_5, window_bounds = array<i64: 512, 512>}, {pipeline_mode = #tpu.pipeline_mode<synchronous>, transform_indices = @transform_6, window_bounds = array<i64: 1, 512>}, {pipeline_mode = #tpu.pipeline_mode<synchronous>, transform_indices = @transform_7, window_bounds = array<i64: 2, 512>}, {pipeline_mode = #tpu.pipeline_mode<synchronous>, transform_indices = @transform_8, window_bounds = array<i64: 1, 2>}, {transform_indices = @transform_9, window_bounds = array<i64: 8, 2>}]} {
    %c0 = arith.constant 0 : index
    %c0_0 = arith.constant 0 : index
    %0 = vector.load %arg1[%c0, %c0_0] : memref<8x2xf32, #tpu.memory_space<vmem>>, vector<8x2xf32>
    %c0_1 = arith.constant 0 : index
    %c0_2 = arith.constant 0 : index
    %1 = vector.load %arg2[%c0_1, %c0_2] : memref<2x512xbf16, #tpu.memory_space<vmem>>, vector<2x512xbf16>
    %2 = arith.extf %1 : vector<2x512xbf16> to vector<2x512xf32>
    %c0_3 = arith.constant 0 : index
    %c0_4 = arith.constant 0 : index
    %3 = vector.load %arg3[%c0_3, %c0_4] : memref<1x512xf32, #tpu.memory_space<vmem>>, vector<1x512xf32>
    %4 = vector.extract_strided_slice %0 {offsets = [0, 0], sizes = [8, 1], strides = [1, 1]} : vector<8x2xf32> to vector<8x1xf32>
    %5 = vector.extract_strided_slice %2 {offsets = [0, 0], sizes = [1, 512], strides = [1, 1]} : vector<2x512xf32> to vector<1x512xf32>
    %6 = vector.broadcast %4 : vector<8x1xf32> to vector<8x512xf32>
    %7 = vector.broadcast %5 : vector<1x512xf32> to vector<8x512xf32>
    %8 = arith.mulf %6, %7 : vector<8x512xf32>
    %9 = vector.broadcast %3 : vector<1x512xf32> to vector<8x512xf32>
    %10 = arith.addf %9, %8 : vector<8x512xf32>
    %11 = vector.extract_strided_slice %0 {offsets = [0, 1], sizes = [8, 1], strides = [1, 1]} : vector<8x2xf32> to vector<8x1xf32>
    %12 = vector.extract_strided_slice %2 {offsets = [1, 0], sizes = [1, 512], strides = [1, 1]} : vector<2x512xf32> to vector<1x512xf32>
    %13 = vector.broadcast %11 : vector<8x1xf32> to vector<8x512xf32>
    %14 = vector.broadcast %12 : vector<1x512xf32> to vector<8x512xf32>
    %15 = arith.mulf %13, %14 : vector<8x512xf32>
    %16 = arith.addf %10, %15 : vector<8x512xf32>
    %cst = arith.constant 0.000000e+00 : f32
    %17 = vector.broadcast %cst : f32 to vector<8x512xf32>
    %18 = arith.maximumf %16, %17 : vector<8x512xf32>
    %19 = arith.truncf %18 : vector<8x512xf32> to vector<8x512xbf16>
    %c0_5 = arith.constant 0 : index
    %c0_6 = arith.constant 0 : index
    %20 = vector.load %arg4[%c0_5, %c0_6] : memref<512x512xbf16, #tpu.memory_space<vmem>>, vector<512x512xbf16>
    %cst_7 = arith.constant dense<0.000000e+00> : vector<8x512xf32>
    %21 = tpu.matmul %19, %20, %cst_7 {dimension_numbers = #tpu.dot_dimension_numbers<[1], [0], [0], [1], [0, 0, 1, 1], [], []>} : vector<8x512xbf16>, vector<512x512xbf16>, vector<8x512xf32> -> vector<8x512xf32>
    %c0_8 = arith.constant 0 : index
    %c0_9 = arith.constant 0 : index
    %22 = vector.load %arg5[%c0_8, %c0_9] : memref<1x512xf32, #tpu.memory_space<vmem>>, vector<1x512xf32>
    %23 = vector.broadcast %22 : vector<1x512xf32> to vector<8x512xf32>
    %24 = arith.addf %21, %23 : vector<8x512xf32>
    %cst_10 = arith.constant 0.000000e+00 : f32
    %25 = vector.broadcast %cst_10 : f32 to vector<8x512xf32>
    %26 = arith.maximumf %24, %25 : vector<8x512xf32>
    %27 = arith.truncf %26 : vector<8x512xf32> to vector<8x512xbf16>
    %c0_11 = arith.constant 0 : index
    %c0_12 = arith.constant 0 : index
    %28 = vector.load %arg6[%c0_11, %c0_12] : memref<512x512xbf16, #tpu.memory_space<vmem>>, vector<512x512xbf16>
    %cst_13 = arith.constant dense<0.000000e+00> : vector<8x512xf32>
    %29 = tpu.matmul %27, %28, %cst_13 {dimension_numbers = #tpu.dot_dimension_numbers<[1], [0], [0], [1], [0, 0, 1, 1], [], []>} : vector<8x512xbf16>, vector<512x512xbf16>, vector<8x512xf32> -> vector<8x512xf32>
    %c0_14 = arith.constant 0 : index
    %c0_15 = arith.constant 0 : index
    %30 = vector.load %arg7[%c0_14, %c0_15] : memref<1x512xf32, #tpu.memory_space<vmem>>, vector<1x512xf32>
    %31 = vector.broadcast %30 : vector<1x512xf32> to vector<8x512xf32>
    %32 = arith.addf %29, %31 : vector<8x512xf32>
    %cst_16 = arith.constant 0.000000e+00 : f32
    %33 = vector.broadcast %cst_16 : f32 to vector<8x512xf32>
    %34 = arith.maximumf %32, %33 : vector<8x512xf32>
    %c0_17 = arith.constant 0 : index
    %c0_18 = arith.constant 0 : index
    %35 = vector.load %arg9[%c0_17, %c0_18] : memref<1x2xf32, #tpu.memory_space<vmem>>, vector<1x2xf32>
    %c0_19 = arith.constant 0 : index
    %c0_20 = arith.constant 0 : index
    %36 = vector.load %arg8[%c0_19, %c0_20] : memref<2x512xbf16, #tpu.memory_space<vmem>>, vector<2x512xbf16>
    %37 = arith.extf %36 : vector<2x512xbf16> to vector<2x512xf32>
    %38 = vector.extract_strided_slice %37 {offsets = [0, 0], sizes = [1, 512], strides = [1, 1]} : vector<2x512xf32> to vector<1x512xf32>
    %39 = vector.broadcast %38 : vector<1x512xf32> to vector<8x512xf32>
    %40 = arith.mulf %34, %39 : vector<8x512xf32>
    %cst_21 = arith.constant dense<0.000000e+00> : vector<8xf32>
    %41 = vector.multi_reduction <add>, %40, %cst_21 [1] : vector<8x512xf32> to vector<8xf32>
    %42 = vector.shape_cast %41 : vector<8xf32> to vector<8x1xf32>
    %43 = vector.extract_strided_slice %35 {offsets = [0, 0], sizes = [1, 1], strides = [1, 1]} : vector<1x2xf32> to vector<1x1xf32>
    %44 = vector.broadcast %43 : vector<1x1xf32> to vector<8x1xf32>
    %45 = arith.addf %42, %44 : vector<8x1xf32>
    %c0_22 = arith.constant 0 : index
    %c0_23 = arith.constant 0 : index
    %46 = vector.load %arg10[%c0_22, %c0_23] : memref<8x2xf32, #tpu.memory_space<vmem>>, vector<8x1xf32>
    tpu.vector_store %arg10[%c0_22, %c0_23], %45 {strides = array<i32>} : memref<8x2xf32, #tpu.memory_space<vmem>>, vector<8x1xf32>,
    %47 = vector.extract_strided_slice %37 {offsets = [1, 0], sizes = [1, 512], strides = [1, 1]} : vector<2x512xf32> to vector<1x512xf32>
    %48 = vector.broadcast %47 : vector<1x512xf32> to vector<8x512xf32>
    %49 = arith.mulf %34, %48 : vector<8x512xf32>
    %cst_24 = arith.constant dense<0.000000e+00> : vector<8xf32>
    %50 = vector.multi_reduction <add>, %49, %cst_24 [1] : vector<8x512xf32> to vector<8xf32>
    %51 = vector.shape_cast %50 : vector<8xf32> to vector<8x1xf32>
    %52 = vector.extract_strided_slice %35 {offsets = [0, 1], sizes = [1, 1], strides = [1, 1]} : vector<1x2xf32> to vector<1x1xf32>
    %53 = vector.broadcast %52 : vector<1x1xf32> to vector<8x1xf32>
    %54 = arith.addf %51, %53 : vector<8x1xf32>
    %c0_25 = arith.constant 0 : index
    %c1 = arith.constant 1 : index
    %55 = vector.load %arg10[%c0_25, %c1] : memref<8x2xf32, #tpu.memory_space<vmem>>, vector<8x1xf32>
    tpu.vector_store %arg10[%c0_25, %c1], %54 {strides = array<i32>} : memref<8x2xf32, #tpu.memory_space<vmem>>, vector<8x1xf32>,
    return
  }
  func.func @transform_0(%arg0: i32) -> (i32, i32) {
    %c0_i32 = arith.constant 0 : i32
    %c0_i32_0 = arith.constant 0 : i32
    return %arg0, %c0_i32 : i32, i32
  }
  func.func @transform_1(%arg0: i32) -> (i32, i32) {
    %c0_i32 = arith.constant 0 : i32
    %c0_i32_0 = arith.constant 0 : i32
    %c0_i32_1 = arith.constant 0 : i32
    return %c0_i32, %c0_i32_0 : i32, i32
  }
  func.func @transform_2(%arg0: i32) -> (i32, i32) {
    %c0_i32 = arith.constant 0 : i32
    %c0_i32_0 = arith.constant 0 : i32
    %c0_i32_1 = arith.constant 0 : i32
    return %c0_i32, %c0_i32_0 : i32, i32
  }
  func.func @transform_3(%arg0: i32) -> (i32, i32) {
    %c0_i32 = arith.constant 0 : i32
    %c0_i32_0 = arith.constant 0 : i32
    %c0_i32_1 = arith.constant 0 : i32
    return %c0_i32, %c0_i32_0 : i32, i32
  }
  func.func @transform_4(%arg0: i32) -> (i32, i32) {
    %c0_i32 = arith.constant 0 : i32
    %c0_i32_0 = arith.constant 0 : i32
    %c0_i32_1 = arith.constant 0 : i32
    return %c0_i32, %c0_i32_0 : i32, i32
  }
  func.func @transform_5(%arg0: i32) -> (i32, i32) {
    %c0_i32 = arith.constant 0 : i32
    %c0_i32_0 = arith.constant 0 : i32
    %c0_i32_1 = arith.constant 0 : i32
    return %c0_i32, %c0_i32_0 : i32, i32
  }
  func.func @transform_6(%arg0: i32) -> (i32, i32) {
    %c0_i32 = arith.constant 0 : i32
    %c0_i32_0 = arith.constant 0 : i32
    %c0_i32_1 = arith.constant 0 : i32
    return %c0_i32, %c0_i32_0 : i32, i32
  }
  func.func @transform_7(%arg0: i32) -> (i32, i32) {
    %c0_i32 = arith.constant 0 : i32
    %c0_i32_0 = arith.constant 0 : i32
    %c0_i32_1 = arith.constant 0 : i32
    return %c0_i32, %c0_i32_0 : i32, i32
  }
  func.func @transform_8(%arg0: i32) -> (i32, i32) {
    %c0_i32 = arith.constant 0 : i32
    %c0_i32_0 = arith.constant 0 : i32
    %c0_i32_1 = arith.constant 0 : i32
    return %c0_i32, %c0_i32_0 : i32, i32
  }
  func.func @transform_9(%arg0: i32) -> (i32, i32) {
    %c0_i32 = arith.constant 0 : i32
    %c0_i32_0 = arith.constant 0 : i32
    return %arg0, %c0_i32 : i32, i32
  }
}

</mosaic_0001>

<llo_original>
// kernel: generator_forward.1
$region0: #{generator_forward.1}
  #allocation0 [shape = 'u32[]', space=smem, size = 0x4, offset = 0x4, fixed_abs, tag = 'smem constant byte address 0x4 - core index']
  #allocation1 [shape = 'u32[144,128]{1,0:T(1,128)}', space=vmem, size = 0x12000, scoped, tag = 'internal scratch']
  %s0 = inlined_call_operand.vmem [shape: f32[8,2], index: 0, kind: input, shape index: {}]
  %s1 = inlined_call_operand.vmem [shape: bf16[2,512], index: 1, kind: input, shape index: {}]
  %s2 = inlined_call_operand.vmem [shape: f32[1,512], index: 2, kind: input, shape index: {}]
  %s3 = inlined_call_operand.hbm [shape: bf16[512,512], index: 3, kind: input, shape index: {}]
  %s4 = inlined_call_operand.vmem [shape: f32[1,512], index: 4, kind: input, shape index: {}]
  %s5 = inlined_call_operand.hbm [shape: bf16[512,512], index: 5, kind: input, shape index: {}]
  %s6 = inlined_call_operand.vmem [shape: f32[1,512], index: 6, kind: input, shape index: {}]
  %s7 = inlined_call_operand.vmem [shape: bf16[2,512], index: 7, kind: input, shape index: {}]
  %s8 = inlined_call_operand.vmem [shape: f32[1,2], index: 8, kind: input, shape index: {}]
  %s9 = inlined_call_operand.vmem [shape: f32[8,2], index: 9, kind: output, shape index: {}]
  %s10 = sld [smem:[#allocation0]]
  $region54: #{generator_forward.1} parent=0
    _
  %s12 = ssub.s32 1, %s10
  %s13 = scalar_select 0, %s12, %s10
  $region1: #{generator_forward.1} parent=0
    #allocation2 [shape = 'u8[524288]{0}', space=vmem, size = 0x80000, scoped, tag = 'input window, operand 3, single buffered']
    #allocation3 [shape = 's32[1]{0}', space=sflag, size = 0x4, scoped, tag = 'scoped memory for generator_forward.1']
    #allocation4 [shape = 'u8[524288]{0}', space=vmem, size = 0x80000, scoped, tag = 'input window, operand 5, single buffered']
    #allocation5 [shape = 's32[1]{0}', space=sflag, size = 0x4, scoped, tag = 'scoped memory for generator_forward.1']
    %14 = vsyncpa [#allocation3], 0
    %15 = vsyncpa [#allocation5], 0
    // Predicated region
    $region2: #{generator_forward.1} parent=1 // pred_check
      _
    $region3: #{generator_forward.1} parent=1 // pred_check_branch
      %17 = sbr.rel (0) target = $region5
    $region4: #{generator_forward.1} parent=1 // pred_region
      _
    $region5: #{generator_forward.1} parent=1 // pred_fallthru
      _
    // Predicated region
    $region6: #{generator_forward.1} parent=1 // pred_check
      _
    $region7: #{generator_forward.1} parent=1 // pred_check_branch
      %19 = sbr.rel (0) target = $region9
    $region8: #{generator_forward.1} parent=1 // pred_region
      _
    $region9: #{generator_forward.1} parent=1 // pred_fallthru
      _
    // Predicated region
    $region10: #{generator_forward.1} parent=1 // pred_check
      _
    $region11: #{generator_forward.1} parent=1 // pred_check_branch
      %21 = sbr.rel (0) target = $region13
    $region12: #{generator_forward.1} parent=1 // pred_region
      _
    $region13: #{generator_forward.1} parent=1 // pred_fallthru
      _
    // Predicated region
    $region14: #{generator_forward.1} parent=1 // pred_check
      _
    $region15: #{generator_forward.1} parent=1 // pred_check_branch
      %23 = sbr.rel (0) target = $region17
    $region16: #{generator_forward.1} parent=1 // pred_region
      %s25 = ssub.s32 16384, 16384
      %26 = vsyncadd [#allocation3], %s25
      %s27 = sshll.u32 [#allocation2], 4
      %s28 = int_to_ptr.vmem [resolvable:$true] %s27
      %33 = dma.hbm_to_vmem [thread:$0]  %s3, 16384, %s28, [#allocation3], 256, 256, 16
    $region17: #{generator_forward.1} parent=1 // pred_fallthru
      _
    // Predicated region
    $region18: #{generator_forward.1} parent=1 // pred_check
      _
    $region19: #{generator_forward.1} parent=1 // pred_check_branch
      %35 = sbr.rel (0) target = $region21
    $region20: #{generator_forward.1} parent=1 // pred_region
      _
    $region21: #{generator_forward.1} parent=1 // pred_fallthru
      _
    // Predicated region
    $region22: #{generator_forward.1} parent=1 // pred_check
      _
    $region23: #{generator_forward.1} parent=1 // pred_check_branch
      %37 = sbr.rel (0) target = $region25
    $region24: #{generator_forward.1} parent=1 // pred_region
      %s39 = ssub.s32 16384, 16384
      %40 = vsyncadd [#allocation5], %s39
      %s41 = sshll.u32 [#allocation4], 4
      %s42 = int_to_ptr.vmem [resolvable:$true] %s41
      %47 = dma.hbm_to_vmem [thread:$0]  %s5, 16384, %s42, [#allocation5], 256, 256, 16
    $region25: #{generator_forward.1} parent=1 // pred_fallthru
      _
    // Predicated region
    $region26: #{generator_forward.1} parent=1 // pred_check
      _
    $region27: #{generator_forward.1} parent=1 // pred_check_branch
      %49 = sbr.rel (0) target = $region29
    $region28: #{generator_forward.1} parent=1 // pred_region
      _
    $region29: #{generator_forward.1} parent=1 // pred_fallthru
      _
    // Predicated region
    $region30: #{generator_forward.1} parent=1 // pred_check
      _
    $region31: #{generator_forward.1} parent=1 // pred_check_branch
      %51 = sbr.rel (0) target = $region33
    $region32: #{generator_forward.1} parent=1 // pred_region
      _
    $region33: #{generator_forward.1} parent=1 // pred_fallthru
      _
    // Predicated region
    $region34: #{generator_forward.1} parent=1 // pred_check
      _
    $region35: #{generator_forward.1} parent=1 // pred_check_branch
      %53 = sbr.rel (0) target = $region37
    $region36: #{generator_forward.1} parent=1 // pred_region
      _
    $region37: #{generator_forward.1} parent=1 // pred_fallthru
      _
    // Predicated region
    $region38: #{generator_forward.1} parent=1 // pred_check
      _
    $region39: #{generator_forward.1} parent=1 // pred_check_branch
      %55 = sbr.rel (0) target = $region41
    $region40: #{generator_forward.1} parent=1 // pred_region
      %56 = dma.done [#allocation3], 16384
    $region41: #{generator_forward.1} parent=1 // pred_fallthru
      _
    // Predicated region
    $region42: #{generator_forward.1} parent=1 // pred_check
      _
    $region43: #{generator_forward.1} parent=1 // pred_check_branch
      %58 = sbr.rel (0) target = $region45
    $region44: #{generator_forward.1} parent=1 // pred_region
      %59 = dma.done [#allocation5], 16384
    $region45: #{generator_forward.1} parent=1 // pred_fallthru
      _
    %v60 = vld [vmem:[%s0] sm:$0xff]
    %v61 = vld [vmem:[%s1] sm:$0xf]
    %v62 = vunpack.c.l.bf16 %v61
    %v63 = vld [vmem:[%s2] sm:$0xf]
    %65 = vset.pattern.permute.xlu0 0
    %66 = vperm.xlu0 %65, %v60
    %v67 = vpop.permute.xlu0 %66
    %v70 = vlaneseq
    %v71 = vshrl.u32 %v70, 7
    %v72 = vsub.s32 0, %v71
    %v73 = vrot.slane %v62, %v72
    %v74 = vlaneseq
    %v75 = vshrl.u32 %v74, 7
    %v76 = vsub.s32 2, %v75
    %v77 = vrot.slane %v62, %v76
    %v78 = vlaneseq
    %v79 = vshrl.u32 %v78, 7
    %v80 = vsub.s32 4, %v79
    %v81 = vrot.slane %v62, %v80
    %v82 = vlaneseq
    %v83 = vshrl.u32 %v82, 7
    %v84 = vsub.s32 6, %v83
    %v85 = vrot.slane %v62, %v84
    %v90 = vlaneseq
    %v91 = vshrl.u32 %v90, 7
    %v92 = vsub.s32 0, %v91
    %v93 = vrot.slane %v73, %v92
    %v94 = vlaneseq
    %v95 = vshrl.u32 %v94, 7
    %v96 = vsub.s32 0, %v95
    %v97 = vrot.slane %v77, %v96
    %v98 = vlaneseq
    %v99 = vshrl.u32 %v98, 7
    %v100 = vsub.s32 0, %v99
    %v101 = vrot.slane %v81, %v100
    %v102 = vlaneseq
    %v103 = vshrl.u32 %v102, 7
    %v104 = vsub.s32 0, %v103
    %v105 = vrot.slane %v85, %v104
    %v106 = vmul.f32 %v67, %v93
    %v107 = vmul.f32 %v67, %v97
    %v108 = vmul.f32 %v67, %v101
    %v109 = vmul.f32 %v67, %v105
    %v111 = vlaneseq
    %v112 = vshrl.u32 %v111, 7
    %v113 = vsub.s32 0, %v112
    %v114 = vrot.slane %v63, %v113
    %v115 = vlaneseq
    %v116 = vshrl.u32 %v115, 7
    %v117 = vsub.s32 1, %v116
    %v118 = vrot.slane %v63, %v117
    %v119 = vlaneseq
    %v120 = vshrl.u32 %v119, 7
    %v121 = vsub.s32 2, %v120
    %v122 = vrot.slane %v63, %v121
    %v123 = vlaneseq
    %v124 = vshrl.u32 %v123, 7
    %v125 = vsub.s32 3, %v124
    %v126 = vrot.slane %v63, %v125
    %v131 = vadd.f32 %v114, %v106
    %v132 = vadd.f32 %v118, %v107
    %v133 = vadd.f32 %v122, %v108
    %v134 = vadd.f32 %v126, %v109
    %135 = vset.pattern.permute.xlu0 1
    %136 = vperm.xlu0 %135, %v60
    %v137 = vpop.permute.xlu0 %136
    %v139 = vlaneseq
    %v140 = vshrl.u32 %v139, 7
    %v141 = vsub.s32 1, %v140
    %v142 = vrot.slane %v62, %v141
    %v143 = vlaneseq
    %v144 = vshrl.u32 %v143, 7
    %v145 = vsub.s32 3, %v144
    %v146 = vrot.slane %v62, %v145
    %v147 = vlaneseq
    %v148 = vshrl.u32 %v147, 7
    %v149 = vsub.s32 5, %v148
    %v150 = vrot.slane %v62, %v149
    %v151 = vlaneseq
    %v152 = vshrl.u32 %v151, 7
    %v153 = vsub.s32 7, %v152
    %v154 = vrot.slane %v62, %v153
    %v159 = vlaneseq
    %v160 = vshrl.u32 %v159, 7
    %v161 = vsub.s32 1, %v160
    %v162 = vrot.slane %v142, %v161
    %v163 = vlaneseq
    %v164 = vshrl.u32 %v163, 7
    %v165 = vsub.s32 1, %v164
    %v166 = vrot.slane %v146, %v165
    %v167 = vlaneseq
    %v168 = vshrl.u32 %v167, 7
    %v169 = vsub.s32 1, %v168
    %v170 = vrot.slane %v150, %v169
    %v171 = vlaneseq
    %v172 = vshrl.u32 %v171, 7
    %v173 = vsub.s32 1, %v172
    %v174 = vrot.slane %v154, %v173
    %v175 = vmul.f32 %v137, %v162
    %v176 = vmul.f32 %v137, %v166
    %v177 = vmul.f32 %v137, %v170
    %v178 = vmul.f32 %v137, %v174
    %v179 = vadd.f32 %v131, %v175
    %v180 = vadd.f32 %v132, %v176
    %v181 = vadd.f32 %v133, %v177
    %v182 = vadd.f32 %v134, %v178
    %v183 = vmax.f32 %v179, 0.0
    %v184 = vmax.f32 %v180, 0.0
    %v185 = vmax.f32 %v181, 0.0
    %v186 = vmax.f32 %v182, 0.0
    %v187 = vpack.c.bf16 %v183, %v183
    %v188 = vpack.c.bf16 %v184, %v184
    %v189 = vpack.c.bf16 %v185, %v185
    %v190 = vpack.c.bf16 %v186, %v186
    %v191 = vld [vmem:[#allocation2] sm:$0xff]
    %v192 = vld [vmem:[#allocation2 + $0x8] sm:$0xff]
    %v193 = vld [vmem:[#allocation2 + $0x10] sm:$0xff]
    %v194 = vld [vmem:[#allocation2 + $0x18] sm:$0xff]
    %v195 = vld [vmem:[#allocation2 + $0x20] sm:$0xff]
    %v196 = vld [vmem:[#allocation2 + $0x28] sm:$0xff]
    %v197 = vld [vmem:[#allocation2 + $0x30] sm:$0xff]
    %v198 = vld [vmem:[#allocation2 + $0x38] sm:$0xff]
    %v199 = vld [vmem:[#allocation2 + $0x40] sm:$0xff]
    %v200 = vld [vmem:[#allocation2 + $0x48] sm:$0xff]
    %v201 = vld [vmem:[#allocation2 + $0x50] sm:$0xff]
    %v202 = vld [vmem:[#allocation2 + $0x58] sm:$0xff]
    %v203 = vld [vmem:[#allocation2 + $0x60] sm:$0xff]
    %v204 = vld [vmem:[#allocation2 + $0x68] sm:$0xff]
    %v205 = vld [vmem:[#allocation2 + $0x70] sm:$0xff]
    %v206 = vld [vmem:[#allocation2 + $0x78] sm:$0xff]
    %v207 = vld [vmem:[#allocation2 + $0x80] sm:$0xff]
    %v208 = vld [vmem:[#allocation2 + $0x88] sm:$0xff]
    %v209 = vld [vmem:[#allocation2 + $0x90] sm:$0xff]
    %v210 = vld [vmem:[#allocation2 + $0x98] sm:$0xff]
    %v211 = vld [vmem:[#allocation2 + $0xa0] sm:$0xff]
    %v212 = vld [vmem:[#allocation2 + $0xa8] sm:$0xff]
    %v213 = vld [vmem:[#allocation2 + $0xb0] sm:$0xff]
    %v214 = vld [vmem:[#allocation2 + $0xb8] sm:$0xff]
    %v215 = vld [vmem:[#allocation2 + $0xc0] sm:$0xff]
    %v216 = vld [vmem:[#allocation2 + $0xc8] sm:$0xff]
    %v217 = vld [vmem:[#allocation2 + $0xd0] sm:$0xff]
    %v218 = vld [vmem:[#allocation2 + $0xd8] sm:$0xff]
    %v219 = vld [vmem:[#allocation2 + $0xe0] sm:$0xff]
    %v220 = vld [vmem:[#allocation2 + $0xe8] sm:$0xff]
    %v221 = vld [vmem:[#allocation2 + $0xf0] sm:$0xff]
    %v222 = vld [vmem:[#allocation2 + $0xf8] sm:$0xff]
    %v223 = vld [vmem:[#allocation2 + $0x100] sm:$0xff]
    %v224 = vld [vmem:[#allocation2 + $0x108] sm:$0xff]
    %v225 = vld [vmem:[#allocation2 + $0x110] sm:$0xff]
    %v226 = vld [vmem:[#allocation2 + $0x118] sm:$0xff]
    %v227 = vld [vmem:[#allocation2 + $0x120] sm:$0xff]
    %v228 = vld [vmem:[#allocation2 + $0x128] sm:$0xff]
    %v229 = vld [vmem:[#allocation2 + $0x130] sm:$0xff]
    %v230 = vld [vmem:[#allocation2 + $0x138] sm:$0xff]
    %v231 = vld [vmem:[#allocation2 + $0x140] sm:$0xff]
    %v232 = vld [vmem:[#allocation2 + $0x148] sm:$0xff]
    %v233 = vld [vmem:[#allocation2 + $0x150] sm:$0xff]
    %v234 = vld [vmem:[#allocation2 + $0x158] sm:$0xff]
    %v235 = vld [vmem:[#allocation2 + $0x160] sm:$0xff]
    %v236 = vld [vmem:[#allocation2 + $0x168] sm:$0xff]
    %v237 = vld [vmem:[#allocation2 + $0x170] sm:$0xff]
    %v238 = vld [vmem:[#allocation2 + $0x178] sm:$0xff]
    %v239 = vld [vmem:[#allocation2 + $0x180] sm:$0xff]
    %v240 = vld [vmem:[#allocation2 + $0x188] sm:$0xff]
    %v241 = vld [vmem:[#allocation2 + $0x190] sm:$0xff]
    %v242 = vld [vmem:[#allocation2 + $0x198] sm:$0xff]
    %v243 = vld [vmem:[#allocation2 + $0x1a0] sm:$0xff]
    %v244 = vld [vmem:[#allocation2 + $0x1a8] sm:$0xff]
    %v245 = vld [vmem:[#allocation2 + $0x1b0] sm:$0xff]
    %v246 = vld [vmem:[#allocation2 + $0x1b8] sm:$0xff]
    %v247 = vld [vmem:[#allocation2 + $0x1c0] sm:$0xff]
    %v248 = vld [vmem:[#allocation2 + $0x1c8] sm:$0xff]
    %v249 = vld [vmem:[#allocation2 + $0x1d0] sm:$0xff]
    %v250 = vld [vmem:[#allocation2 + $0x1d8] sm:$0xff]
    %v251 = vld [vmem:[#allocation2 + $0x1e0] sm:$0xff]
    %v252 = vld [vmem:[#allocation2 + $0x1e8] sm:$0xff]
    %v253 = vld [vmem:[#allocation2 + $0x1f0] sm:$0xff]
    %v254 = vld [vmem:[#allocation2 + $0x1f8] sm:$0xff]
    %v255 = vld [vmem:[#allocation2 + $0x200] sm:$0xff]
    %v256 = vld [vmem:[#allocation2 + $0x208] sm:$0xff]
    %v257 = vld [vmem:[#allocation2 + $0x210] sm:$0xff]
    %v258 = vld [vmem:[#allocation2 + $0x218] sm:$0xff]
    %v259 = vld [vmem:[#allocation2 + $0x220] sm:$0xff]
    %v260 = vld [vmem:[#allocation2 + $0x228] sm:$0xff]
    %v261 = vld [vmem:[#allocation2 + $0x230] sm:$0xff]
    %v262 = vld [vmem:[#allocation2 + $0x238] sm:$0xff]
    %v263 = vld [vmem:[#allocation2 + $0x240] sm:$0xff]
    %v264 = vld [vmem:[#allocation2 + $0x248] sm:$0xff]
    %v265 = vld [vmem:[#allocation2 + $0x250] sm:$0xff]
    %v266 = vld [vmem:[#allocation2 + $0x258] sm:$0xff]
    %v267 = vld [vmem:[#allocation2 + $0x260] sm:$0xff]
    %v268 = vld [vmem:[#allocation2 + $0x268] sm:$0xff]
    %v269 = vld [vmem:[#allocation2 + $0x270] sm:$0xff]
    %v270 = vld [vmem:[#allocation2 + $0x278] sm:$0xff]
    %v271 = vld [vmem:[#allocation2 + $0x280] sm:$0xff]
    %v272 = vld [vmem:[#allocation2 + $0x288] sm:$0xff]
    %v273 = vld [vmem:[#allocation2 + $0x290] sm:$0xff]
    %v274 = vld [vmem:[#allocation2 + $0x298] sm:$0xff]
    %v275 = vld [vmem:[#allocation2 + $0x2a0] sm:$0xff]
    %v276 = vld [vmem:[#allocation2 + $0x2a8] sm:$0xff]
    %v277 = vld [vmem:[#allocation2 + $0x2b0] sm:$0xff]
    %v278 = vld [vmem:[#allocation2 + $0x2b8] sm:$0xff]
    %v279 = vld [vmem:[#allocation2 + $0x2c0] sm:$0xff]
    %v280 = vld [vmem:[#allocation2 + $0x2c8] sm:$0xff]
    %v281 = vld [vmem:[#allocation2 + $0x2d0] sm:$0xff]
    %v282 = vld [vmem:[#allocation2 + $0x2d8] sm:$0xff]
    %v283 = vld [vmem:[#allocation2 + $0x2e0] sm:$0xff]
    %v284 = vld [vmem:[#allocation2 + $0x2e8] sm:$0xff]
    %v285 = vld [vmem:[#allocation2 + $0x2f0] sm:$0xff]
    %v286 = vld [vmem:[#allocation2 + $0x2f8] sm:$0xff]
    %v287 = vld [vmem:[#allocation2 + $0x300] sm:$0xff]
    %v288 = vld [vmem:[#allocation2 + $0x308] sm:$0xff]
    %v289 = vld [vmem:[#allocation2 + $0x310] sm:$0xff]
    %v290 = vld [vmem:[#allocation2 + $0x318] sm:$0xff]
    %v291 = vld [vmem:[#allocation2 + $0x320] sm:$0xff]
    %v292 = vld [vmem:[#allocation2 + $0x328] sm:$0xff]
    %v293 = vld [vmem:[#allocation2 + $0x330] sm:$0xff]
    %v294 = vld [vmem:[#allocation2 + $0x338] sm:$0xff]
    %v295 = vld [vmem:[#allocation2 + $0x340] sm:$0xff]
    %v296 = vld [vmem:[#allocation2 + $0x348] sm:$0xff]
    %v297 = vld [vmem:[#allocation2 + $0x350] sm:$0xff]
    %v298 = vld [vmem:[#allocation2 + $0x358] sm:$0xff]
    %v299 = vld [vmem:[#allocation2 + $0x360] sm:$0xff]
    %v300 = vld [vmem:[#allocation2 + $0x368] sm:$0xff]
    %v301 = vld [vmem:[#allocation2 + $0x370] sm:$0xff]
    %v302 = vld [vmem:[#allocation2 + $0x378] sm:$0xff]
    %v303 = vld [vmem:[#allocation2 + $0x380] sm:$0xff]
    %v304 = vld [vmem:[#allocation2 + $0x388] sm:$0xff]
    %v305 = vld [vmem:[#allocation2 + $0x390] sm:$0xff]
    %v306 = vld [vmem:[#allocation2 + $0x398] sm:$0xff]
    %v307 = vld [vmem:[#allocation2 + $0x3a0] sm:$0xff]
    %v308 = vld [vmem:[#allocation2 + $0x3a8] sm:$0xff]
    %v309 = vld [vmem:[#allocation2 + $0x3b0] sm:$0xff]
    %v310 = vld [vmem:[#allocation2 + $0x3b8] sm:$0xff]
    %v311 = vld [vmem:[#allocation2 + $0x3c0] sm:$0xff]
    %v312 = vld [vmem:[#allocation2 + $0x3c8] sm:$0xff]
    %v313 = vld [vmem:[#allocation2 + $0x3d0] sm:$0xff]
    %v314 = vld [vmem:[#allocation2 + $0x3d8] sm:$0xff]
    %v315 = vld [vmem:[#allocation2 + $0x3e0] sm:$0xff]
    %v316 = vld [vmem:[#allocation2 + $0x3e8] sm:$0xff]
    %v317 = vld [vmem:[#allocation2 + $0x3f0] sm:$0xff]
    %v318 = vld [vmem:[#allocation2 + $0x3f8] sm:$0xff]
    %v319 = vld [vmem:[%s4] sm:$0xf]
    %v321 = vlaneseq
    %v322 = vshrl.u32 %v321, 7
    %v323 = vsub.s32 0, %v322
    %v324 = vrot.slane %v319, %v323
    %v325 = vlaneseq
    %v326 = vshrl.u32 %v325, 7
    %v327 = vsub.s32 1, %v326
    %v328 = vrot.slane %v319, %v327
    %v329 = vlaneseq
    %v330 = vshrl.u32 %v329, 7
    %v331 = vsub.s32 2, %v330
    %v332 = vrot.slane %v319, %v331
    %v333 = vlaneseq
    %v334 = vshrl.u32 %v333, 7
    %v335 = vsub.s32 3, %v334
    %v336 = vrot.slane %v319, %v335
    %v469 = vunpack.c.l.b16 %v191
    %v470 = vunpack.c.h.b16 %v191
    %v471 = vunpack.c.l.b16 %v192
    %v472 = vunpack.c.h.b16 %v192
    %v473 = vunpack.c.l.b16 %v193
    %v474 = vunpack.c.h.b16 %v193
    %v475 = vunpack.c.l.b16 %v194
    %v476 = vunpack.c.h.b16 %v194
    %v477 = vunpack.c.l.b16 %v195
    %v478 = vunpack.c.h.b16 %v195
    %v479 = vunpack.c.l.b16 %v196
    %v480 = vunpack.c.h.b16 %v196
    %v481 = vunpack.c.l.b16 %v197
    %v482 = vunpack.c.h.b16 %v197
    %v483 = vunpack.c.l.b16 %v198
    %v484 = vunpack.c.h.b16 %v198
    %v485 = vunpack.c.l.b16 %v199
    %v486 = vunpack.c.h.b16 %v199
    %v487 = vunpack.c.l.b16 %v200
    %v488 = vunpack.c.h.b16 %v200
    %v489 = vunpack.c.l.b16 %v201
    %v490 = vunpack.c.h.b16 %v201
    %v491 = vunpack.c.l.b16 %v202
    %v492 = vunpack.c.h.b16 %v202
    %v493 = vunpack.c.l.b16 %v203
    %v494 = vunpack.c.h.b16 %v203
    %v495 = vunpack.c.l.b16 %v204
    %v496 = vunpack.c.h.b16 %v204
    %v497 = vunpack.c.l.b16 %v205
    %v498 = vunpack.c.h.b16 %v205
    %v499 = vunpack.c.l.b16 %v206
    %v500 = vunpack.c.h.b16 %v206
    %v501 = vunpack.c.l.b16 %v207
    %v502 = vunpack.c.h.b16 %v207
    %v503 = vunpack.c.l.b16 %v208
    %v504 = vunpack.c.h.b16 %v208
    %v505 = vunpack.c.l.b16 %v209
    %v506 = vunpack.c.h.b16 %v209
    %v507 = vunpack.c.l.b16 %v210
    %v508 = vunpack.c.h.b16 %v210
    %v509 = vunpack.c.l.b16 %v211
    %v510 = vunpack.c.h.b16 %v211
    %v511 = vunpack.c.l.b16 %v212
    %v512 = vunpack.c.h.b16 %v212
    %v513 = vunpack.c.l.b16 %v213
    %v514 = vunpack.c.h.b16 %v213
    %v515 = vunpack.c.l.b16 %v214
    %v516 = vunpack.c.h.b16 %v214
    %v517 = vunpack.c.l.b16 %v215
    %v518 = vunpack.c.h.b16 %v215
    %v519 = vunpack.c.l.b16 %v216
    %v520 = vunpack.c.h.b16 %v216
    %v521 = vunpack.c.l.b16 %v217
    %v522 = vunpack.c.h.b16 %v217
    %v523 = vunpack.c.l.b16 %v218
    %v524 = vunpack.c.h.b16 %v218
    %v525 = vunpack.c.l.b16 %v219
    %v526 = vunpack.c.h.b16 %v219
    %v527 = vunpack.c.l.b16 %v220
    %v528 = vunpack.c.h.b16 %v220
    %v529 = vunpack.c.l.b16 %v221
    %v530 = vunpack.c.h.b16 %v221
    %v531 = vunpack.c.l.b16 %v222
    %v532 = vunpack.c.h.b16 %v222
    %v533 = vunpack.c.l.b16 %v223
    %v534 = vunpack.c.h.b16 %v223
    %v535 = vunpack.c.l.b16 %v224
    %v536 = vunpack.c.h.b16 %v224
    %v537 = vunpack.c.l.b16 %v225
    %v538 = vunpack.c.h.b16 %v225
    %v539 = vunpack.c.l.b16 %v226
    %v540 = vunpack.c.h.b16 %v226
    %v541 = vunpack.c.l.b16 %v227
    %v542 = vunpack.c.h.b16 %v227
    %v543 = vunpack.c.l.b16 %v228
    %v544 = vunpack.c.h.b16 %v228
    %v545 = vunpack.c.l.b16 %v229
    %v546 = vunpack.c.h.b16 %v229
    %v547 = vunpack.c.l.b16 %v230
    %v548 = vunpack.c.h.b16 %v230
    %v549 = vunpack.c.l.b16 %v231
    %v550 = vunpack.c.h.b16 %v231
    %v551 = vunpack.c.l.b16 %v232
    %v552 = vunpack.c.h.b16 %v232
    %v553 = vunpack.c.l.b16 %v233
    %v554 = vunpack.c.h.b16 %v233
    %v555 = vunpack.c.l.b16 %v234
    %v556 = vunpack.c.h.b16 %v234
    %v557 = vunpack.c.l.b16 %v235
    %v558 = vunpack.c.h.b16 %v235
    %v559 = vunpack.c.l.b16 %v236
    %v560 = vunpack.c.h.b16 %v236
    %v561 = vunpack.c.l.b16 %v237
    %v562 = vunpack.c.h.b16 %v237
    %v563 = vunpack.c.l.b16 %v238
    %v564 = vunpack.c.h.b16 %v238
    %v565 = vunpack.c.l.b16 %v239
    %v566 = vunpack.c.h.b16 %v239
    %v567 = vunpack.c.l.b16 %v240
    %v568 = vunpack.c.h.b16 %v240
    %v569 = vunpack.c.l.b16 %v241
    %v570 = vunpack.c.h.b16 %v241
    %v571 = vunpack.c.l.b16 %v242
    %v572 = vunpack.c.h.b16 %v242
    %v573 = vunpack.c.l.b16 %v243
    %v574 = vunpack.c.h.b16 %v243
    %v575 = vunpack.c.l.b16 %v244
    %v576 = vunpack.c.h.b16 %v244
    %v577 = vunpack.c.l.b16 %v245
    %v578 = vunpack.c.h.b16 %v245
    %v579 = vunpack.c.l.b16 %v246
    %v580 = vunpack.c.h.b16 %v246
    %v581 = vunpack.c.l.b16 %v247
    %v582 = vunpack.c.h.b16 %v247
    %v583 = vunpack.c.l.b16 %v248
    %v584 = vunpack.c.h.b16 %v248
    %v585 = vunpack.c.l.b16 %v249
    %v586 = vunpack.c.h.b16 %v249
    %v587 = vunpack.c.l.b16 %v250
    %v588 = vunpack.c.h.b16 %v250
    %v589 = vunpack.c.l.b16 %v251
    %v590 = vunpack.c.h.b16 %v251
    %v591 = vunpack.c.l.b16 %v252
    %v592 = vunpack.c.h.b16 %v252
    %v593 = vunpack.c.l.b16 %v253
    %v594 = vunpack.c.h.b16 %v253
    %v595 = vunpack.c.l.b16 %v254
    %v596 = vunpack.c.h.b16 %v254
    %v597 = vunpack.c.l.b16 %v255
    %v598 = vunpack.c.h.b16 %v255
    %v599 = vunpack.c.l.b16 %v256
    %v600 = vunpack.c.h.b16 %v256
    %v601 = vunpack.c.l.b16 %v257
    %v602 = vunpack.c.h.b16 %v257
    %v603 = vunpack.c.l.b16 %v258
    %v604 = vunpack.c.h.b16 %v258
    %v605 = vunpack.c.l.b16 %v259
    %v606 = vunpack.c.h.b16 %v259
    %v607 = vunpack.c.l.b16 %v260
    %v608 = vunpack.c.h.b16 %v260
    %v609 = vunpack.c.l.b16 %v261
    %v610 = vunpack.c.h.b16 %v261
    %v611 = vunpack.c.l.b16 %v262
    %v612 = vunpack.c.h.b16 %v262
    %v613 = vunpack.c.l.b16 %v263
    %v614 = vunpack.c.h.b16 %v263
    %v615 = vunpack.c.l.b16 %v264
    %v616 = vunpack.c.h.b16 %v264
    %v617 = vunpack.c.l.b16 %v265
    %v618 = vunpack.c.h.b16 %v265
    %v619 = vunpack.c.l.b16 %v266
    %v620 = vunpack.c.h.b16 %v266
    %v621 = vunpack.c.l.b16 %v267
    %v622 = vunpack.c.h.b16 %v267
    %v623 = vunpack.c.l.b16 %v268
    %v624 = vunpack.c.h.b16 %v268
    %v625 = vunpack.c.l.b16 %v269
    %v626 = vunpack.c.h.b16 %v269
    %v627 = vunpack.c.l.b16 %v270
    %v628 = vunpack.c.h.b16 %v270
    %v629 = vunpack.c.l.b16 %v271
    %v630 = vunpack.c.h.b16 %v271
    %v631 = vunpack.c.l.b16 %v272
    %v632 = vunpack.c.h.b16 %v272
    %v633 = vunpack.c.l.b16 %v273
    %v634 = vunpack.c.h.b16 %v273
    %v635 = vunpack.c.l.b16 %v274
    %v636 = vunpack.c.h.b16 %v274
    %v637 = vunpack.c.l.b16 %v275
    %v638 = vunpack.c.h.b16 %v275
    %v639 = vunpack.c.l.b16 %v276
    %v640 = vunpack.c.h.b16 %v276
    %v641 = vunpack.c.l.b16 %v277
    %v642 = vunpack.c.h.b16 %v277
    %v643 = vunpack.c.l.b16 %v278
    %v644 = vunpack.c.h.b16 %v278
    %v645 = vunpack.c.l.b16 %v279
    %v646 = vunpack.c.h.b16 %v279
    %v647 = vunpack.c.l.b16 %v280
    %v648 = vunpack.c.h.b16 %v280
    %v649 = vunpack.c.l.b16 %v281
    %v650 = vunpack.c.h.b16 %v281
    %v651 = vunpack.c.l.b16 %v282
    %v652 = vunpack.c.h.b16 %v282
    %v653 = vunpack.c.l.b16 %v283
    %v654 = vunpack.c.h.b16 %v283
    %v655 = vunpack.c.l.b16 %v284
    %v656 = vunpack.c.h.b16 %v284
    %v657 = vunpack.c.l.b16 %v285
    %v658 = vunpack.c.h.b16 %v285
    %v659 = vunpack.c.l.b16 %v286
    %v660 = vunpack.c.h.b16 %v286
    %v661 = vunpack.c.l.b16 %v287
    %v662 = vunpack.c.h.b16 %v287
    %v663 = vunpack.c.l.b16 %v288
    %v664 = vunpack.c.h.b16 %v288
    %v665 = vunpack.c.l.b16 %v289
    %v666 = vunpack.c.h.b16 %v289
    %v667 = vunpack.c.l.b16 %v290
    %v668 = vunpack.c.h.b16 %v290
    %v669 = vunpack.c.l.b16 %v291
    %v670 = vunpack.c.h.b16 %v291
    %v671 = vunpack.c.l.b16 %v292
    %v672 = vunpack.c.h.b16 %v292
    %v673 = vunpack.c.l.b16 %v293
    %v674 = vunpack.c.h.b16 %v293
    %v675 = vunpack.c.l.b16 %v294
    %v676 = vunpack.c.h.b16 %v294
    %v677 = vunpack.c.l.b16 %v295
    %v678 = vunpack.c.h.b16 %v295
    %v679 = vunpack.c.l.b16 %v296
    %v680 = vunpack.c.h.b16 %v296
    %v681 = vunpack.c.l.b16 %v297
    %v682 = vunpack.c.h.b16 %v297
    %v683 = vunpack.c.l.b16 %v298
    %v684 = vunpack.c.h.b16 %v298
    %v685 = vunpack.c.l.b16 %v299
    %v686 = vunpack.c.h.b16 %v299
    %v687 = vunpack.c.l.b16 %v300
    %v688 = vunpack.c.h.b16 %v300
    %v689 = vunpack.c.l.b16 %v301
    %v690 = vunpack.c.h.b16 %v301
    %v691 = vunpack.c.l.b16 %v302
    %v692 = vunpack.c.h.b16 %v302
    %v693 = vunpack.c.l.b16 %v303
    %v694 = vunpack.c.h.b16 %v303
    %v695 = vunpack.c.l.b16 %v304
    %v696 = vunpack.c.h.b16 %v304
    %v697 = vunpack.c.l.b16 %v305
    %v698 = vunpack.c.h.b16 %v305
    %v699 = vunpack.c.l.b16 %v306
    %v700 = vunpack.c.h.b16 %v306
    %v701 = vunpack.c.l.b16 %v307
    %v702 = vunpack.c.h.b16 %v307
    %v703 = vunpack.c.l.b16 %v308
    %v704 = vunpack.c.h.b16 %v308
    %v705 = vunpack.c.l.b16 %v309
    %v706 = vunpack.c.h.b16 %v309
    %v707 = vunpack.c.l.b16 %v310
    %v708 = vunpack.c.h.b16 %v310
    %v709 = vunpack.c.l.b16 %v311
    %v710 = vunpack.c.h.b16 %v311
    %v711 = vunpack.c.l.b16 %v312
    %v712 = vunpack.c.h.b16 %v312
    %v713 = vunpack.c.l.b16 %v313
    %v714 = vunpack.c.h.b16 %v313
    %v715 = vunpack.c.l.b16 %v314
    %v716 = vunpack.c.h.b16 %v314
    %v717 = vunpack.c.l.b16 %v315
    %v718 = vunpack.c.h.b16 %v315
    %v719 = vunpack.c.l.b16 %v316
    %v720 = vunpack.c.h.b16 %v316
    %v721 = vunpack.c.l.b16 %v317
    %v722 = vunpack.c.h.b16 %v317
    %v723 = vunpack.c.l.b16 %v318
    %v724 = vunpack.c.h.b16 %v318
    %v725 = vpack.c.b16 %v473, %v469
    %v726 = vpack.c.b16 %v474, %v470
    %v727 = vpack.c.b16 %v475, %v471
    %v728 = vpack.c.b16 %v476, %v472
    %v729 = vpack.c.b16 %v481, %v477
    %v730 = vpack.c.b16 %v482, %v478
    %v731 = vpack.c.b16 %v483, %v479
    %v732 = vpack.c.b16 %v484, %v480
    %v733 = vpack.c.b16 %v489, %v485
    %v734 = vpack.c.b16 %v490, %v486
    %v735 = vpack.c.b16 %v491, %v487
    %v736 = vpack.c.b16 %v492, %v488
    %v737 = vpack.c.b16 %v497, %v493
    %v738 = vpack.c.b16 %v498, %v494
    %v739 = vpack.c.b16 %v499, %v495
    %v740 = vpack.c.b16 %v500, %v496
    %v741 = vpack.c.b16 %v505, %v501
    %v742 = vpack.c.b16 %v506, %v502
    %v743 = vpack.c.b16 %v507, %v503
    %v744 = vpack.c.b16 %v508, %v504
    %v745 = vpack.c.b16 %v513, %v509
    %v746 = vpack.c.b16 %v514, %v510
    %v747 = vpack.c.b16 %v515, %v511
    %v748 = vpack.c.b16 %v516, %v512
    %v749 = vpack.c.b16 %v521, %v517
    %v750 = vpack.c.b16 %v522, %v518
    %v751 = vpack.c.b16 %v523, %v519
    %v752 = vpack.c.b16 %v524, %v520
    %v753 = vpack.c.b16 %v529, %v525
    %v754 = vpack.c.b16 %v530, %v526
    %v755 = vpack.c.b16 %v531, %v527
    %v756 = vpack.c.b16 %v532, %v528
    %v757 = vpack.c.b16 %v537, %v533
    %v758 = vpack.c.b16 %v538, %v534
    %v759 = vpack.c.b16 %v539, %v535
    %v760 = vpack.c.b16 %v540, %v536
    %v761 = vpack.c.b16 %v545, %v541
    %v762 = vpack.c.b16 %v546, %v542
    %v763 = vpack.c.b16 %v547, %v543
    %v764 = vpack.c.b16 %v548, %v544
    %v765 = vpack.c.b16 %v553, %v549
    %v766 = vpack.c.b16 %v554, %v550
    %v767 = vpack.c.b16 %v555, %v551
    %v768 = vpack.c.b16 %v556, %v552
    %v769 = vpack.c.b16 %v561, %v557
    %v770 = vpack.c.b16 %v562, %v558
    %v771 = vpack.c.b16 %v563, %v559
    %v772 = vpack.c.b16 %v564, %v560
    %v773 = vpack.c.b16 %v569, %v565
    %v774 = vpack.c.b16 %v570, %v566
    %v775 = vpack.c.b16 %v571, %v567
    %v776 = vpack.c.b16 %v572, %v568
    %v777 = vpack.c.b16 %v577, %v573
    %v778 = vpack.c.b16 %v578, %v574
    %v779 = vpack.c.b16 %v579, %v575
    %v780 = vpack.c.b16 %v580, %v576
    %v781 = vpack.c.b16 %v585, %v581
    %v782 = vpack.c.b16 %v586, %v582
    %v783 = vpack.c.b16 %v587, %v583
    %v784 = vpack.c.b16 %v588, %v584
    %v785 = vpack.c.b16 %v593, %v589
    %v786 = vpack.c.b16 %v594, %v590
    %v787 = vpack.c.b16 %v595, %v591
    %v788 = vpack.c.b16 %v596, %v592
    %v789 = vpack.c.b16 %v601, %v597
    %v790 = vpack.c.b16 %v602, %v598
    %v791 = vpack.c.b16 %v603, %v599
    %v792 = vpack.c.b16 %v604, %v600
    %v793 = vpack.c.b16 %v609, %v605
    %v794 = vpack.c.b16 %v610, %v606
    %v795 = vpack.c.b16 %v611, %v607
    %v796 = vpack.c.b16 %v612, %v608
    %v797 = vpack.c.b16 %v617, %v613
    %v798 = vpack.c.b16 %v618, %v614
    %v799 = vpack.c.b16 %v619, %v615
    %v800 = vpack.c.b16 %v620, %v616
    %v801 = vpack.c.b16 %v625, %v621
    %v802 = vpack.c.b16 %v626, %v622
    %v803 = vpack.c.b16 %v627, %v623
    %v804 = vpack.c.b16 %v628, %v624
    %v805 = vpack.c.b16 %v633, %v629
    %v806 = vpack.c.b16 %v634, %v630
    %v807 = vpack.c.b16 %v635, %v631
    %v808 = vpack.c.b16 %v636, %v632
    %v809 = vpack.c.b16 %v641, %v637
    %v810 = vpack.c.b16 %v642, %v638
    %v811 = vpack.c.b16 %v643, %v639
    %v812 = vpack.c.b16 %v644, %v640
    %v813 = vpack.c.b16 %v649, %v645
    %v814 = vpack.c.b16 %v650, %v646
    %v815 = vpack.c.b16 %v651, %v647
    %v816 = vpack.c.b16 %v652, %v648
    %v817 = vpack.c.b16 %v657, %v653
    %v818 = vpack.c.b16 %v658, %v654
    %v819 = vpack.c.b16 %v659, %v655
    %v820 = vpack.c.b16 %v660, %v656
    %v821 = vpack.c.b16 %v665, %v661
    %v822 = vpack.c.b16 %v666, %v662
    %v823 = vpack.c.b16 %v667, %v663
    %v824 = vpack.c.b16 %v668, %v664
    %v825 = vpack.c.b16 %v673, %v669
    %v826 = vpack.c.b16 %v674, %v670
    %v827 = vpack.c.b16 %v675, %v671
    %v828 = vpack.c.b16 %v676, %v672
    %v829 = vpack.c.b16 %v681, %v677
    %v830 = vpack.c.b16 %v682, %v678
    %v831 = vpack.c.b16 %v683, %v679
    %v832 = vpack.c.b16 %v684, %v680
    %v833 = vpack.c.b16 %v689, %v685
    %v834 = vpack.c.b16 %v690, %v686
    %v835 = vpack.c.b16 %v691, %v687
    %v836 = vpack.c.b16 %v692, %v688
    %v837 = vpack.c.b16 %v697, %v693
    %v838 = vpack.c.b16 %v698, %v694
    %v839 = vpack.c.b16 %v699, %v695
    %v840 = vpack.c.b16 %v700, %v696
    %v841 = vpack.c.b16 %v705, %v701
    %v842 = vpack.c.b16 %v706, %v702
    %v843 = vpack.c.b16 %v707, %v703
    %v844 = vpack.c.b16 %v708, %v704
    %v845 = vpack.c.b16 %v713, %v709
    %v846 = vpack.c.b16 %v714, %v710
    %v847 = vpack.c.b16 %v715, %v711
    %v848 = vpack.c.b16 %v716, %v712
    %v849 = vpack.c.b16 %v721, %v717
    %v850 = vpack.c.b16 %v722, %v718
    %v851 = vpack.c.b16 %v723, %v719
    %v852 = vpack.c.b16 %v724, %v720
    %981 = vmatprep.subr.bf16.mxu0 %v754
    %982 = vmatpush1.bf16.msra.mxu0 %v753
    %983 = vmatprep.subr.bf16.mxu0 %v750
    %984 = vmatpush1.bf16.msra.mxu0 %v749
    %985 = vmatprep.subr.bf16.mxu0 %v746
    %986 = vmatpush1.bf16.msra.mxu0 %v745
    %987 = vmatprep.subr.bf16.mxu0 %v742
    %988 = vmatpush1.bf16.msra.mxu0 %v741
    %989 = vmatprep.subr.bf16.mxu0 %v738
    %990 = vmatpush1.bf16.msra.mxu0 %v737
    %991 = vmatprep.subr.bf16.mxu0 %v734
    %992 = vmatpush1.bf16.msra.mxu0 %v733
    %993 = vmatprep.subr.bf16.mxu0 %v730
    %994 = vmatpush1.bf16.msra.mxu0 %v729
    %995 = vmatprep.subr.bf16.mxu0 %v726
    %996 = vmatpush1.bf16.msra.mxu0 %v725
    %997 = vmatprep.subr.bf16.mxu0 %v786
    %998 = vmatpush2.bf16.msra.mxu0 %v785
    %999 = vmatprep.subr.bf16.mxu0 %v782
    %1000 = vmatpush2.bf16.msra.mxu0 %v781
    %1001 = vmatprep.subr.bf16.mxu0 %v778
    %1002 = vmatpush2.bf16.msra.mxu0 %v777
    %1003 = vmatprep.subr.bf16.mxu0 %v774
    %1004 = vmatpush2.bf16.msra.mxu0 %v773
    %1005 = vmatprep.subr.bf16.mxu0 %v770
    %1006 = vmatpush2.bf16.msra.mxu0 %v769
    %1007 = vmatprep.subr.bf16.mxu0 %v766
    %1008 = vmatpush2.bf16.msra.mxu0 %v765
    %1009 = vmatprep.subr.bf16.mxu0 %v762
    %1010 = vmatpush2.bf16.msra.mxu0 %v761
    %1011 = vmatprep.subr.bf16.mxu0 %v758
    %1012 = vmatpush2.bf16.msra.mxu0 %v757
    %1013 = vmatprep.mubr.bf16.mxu0 %v188
    %1014 = vmatmul.mubr.bf16.gmra.mxu0 %v187
    %v1015 = vpop.f32.mrf.mxu0
    %v1016 = vadd.f32 %v324, %v1015
    %v1017 = vpop.f32.mrf.mxu0
    %v1018 = vadd.f32 %v328, %v1017
    %v1019 = vpop.f32.mrf.mxu0
    %v1020 = vpop.f32.mrf.mxu0
    %1021 = vdwg.mxu0
    %1022 = vmatprep.subr.bf16.mxu0 %v818
    %1023 = vmatpush1.bf16.msra.mxu0 %v817
    %1024 = vmatprep.subr.bf16.mxu0 %v814
    %1025 = vmatpush1.bf16.msra.mxu0 %v813
    %1026 = vmatprep.subr.bf16.mxu0 %v810
    %1027 = vmatpush1.bf16.msra.mxu0 %v809
    %1028 = vmatprep.subr.bf16.mxu0 %v806
    %1029 = vmatpush1.bf16.msra.mxu0 %v805
    %1030 = vmatprep.subr.bf16.mxu0 %v802
    %1031 = vmatpush1.bf16.msra.mxu0 %v801
    %1032 = vmatprep.subr.bf16.mxu0 %v798
    %1033 = vmatpush1.bf16.msra.mxu0 %v797
    %1034 = vmatprep.subr.bf16.mxu0 %v794
    %1035 = vmatpush1.bf16.msra.mxu0 %v793
    %1036 = vmatprep.subr.bf16.mxu0 %v790
    %1037 = vmatpush1.bf16.msra.mxu0 %v789
    %1038 = vmatprep.subr.bf16.mxu0 %v850
    %1039 = vmatpush2.bf16.msra.mxu0 %v849
    %1040 = vmatprep.subr.bf16.mxu0 %v846
    %1041 = vmatpush2.bf16.msra.mxu0 %v845
    %1042 = vmatprep.subr.bf16.mxu0 %v842
    %1043 = vmatpush2.bf16.msra.mxu0 %v841
    %1044 = vmatprep.subr.bf16.mxu0 %v838
    %1045 = vmatpush2.bf16.msra.mxu0 %v837
    %1046 = vmatprep.subr.bf16.mxu0 %v834
    %1047 = vmatpush2.bf16.msra.mxu0 %v833
    %1048 = vmatprep.subr.bf16.mxu0 %v830
    %1049 = vmatpush2.bf16.msra.mxu0 %v829
    %1050 = vmatprep.subr.bf16.mxu0 %v826
    %1051 = vmatpush2.bf16.msra.mxu0 %v825
    %1052 = vmatprep.subr.bf16.mxu0 %v822
    %1053 = vmatpush2.bf16.msra.mxu0 %v821
    %1054 = vmatprep.mubr.bf16.mxu0 %v190
    %1055 = vmatmul.mubr.bf16.gmra.mxu0 %v189
    %v1056 = vpop.f32.mrf.mxu0
    %v1057 = vadd.f32 %v1016, %v1056
    %v1058 = vpop.f32.mrf.mxu0
    %v1059 = vadd.f32 %v1018, %v1058
    %v1060 = vpop.f32.mrf.mxu0
    %v1061 = vpop.f32.mrf.mxu0
    %1062 = vdwg.mxu0
    %1063 = vmatprep.subr.bf16.mxu0 %v756
    %1064 = vmatpush1.bf16.msra.mxu0 %v755
    %1065 = vmatprep.subr.bf16.mxu0 %v752
    %1066 = vmatpush1.bf16.msra.mxu0 %v751
    %1067 = vmatprep.subr.bf16.mxu0 %v748
    %1068 = vmatpush1.bf16.msra.mxu0 %v747
    %1069 = vmatprep.subr.bf16.mxu0 %v744
    %1070 = vmatpush1.bf16.msra.mxu0 %v743
    %1071 = vmatprep.subr.bf16.mxu0 %v740
    %1072 = vmatpush1.bf16.msra.mxu0 %v739
    %1073 = vmatprep.subr.bf16.mxu0 %v736
    %1074 = vmatpush1.bf16.msra.mxu0 %v735
    %1075 = vmatprep.subr.bf16.mxu0 %v732
    %1076 = vmatpush1.bf16.msra.mxu0 %v731
    %1077 = vmatprep.subr.bf16.mxu0 %v728
    %1078 = vmatpush1.bf16.msra.mxu0 %v727
    %1079 = vmatprep.subr.bf16.mxu0 %v788
    %1080 = vmatpush2.bf16.msra.mxu0 %v787
    %1081 = vmatprep.subr.bf16.mxu0 %v784
    %1082 = vmatpush2.bf16.msra.mxu0 %v783
    %1083 = vmatprep.subr.bf16.mxu0 %v780
    %1084 = vmatpush2.bf16.msra.mxu0 %v779
    %1085 = vmatprep.subr.bf16.mxu0 %v776
    %1086 = vmatpush2.bf16.msra.mxu0 %v775
    %1087 = vmatprep.subr.bf16.mxu0 %v772
    %1088 = vmatpush2.bf16.msra.mxu0 %v771
    %1089 = vmatprep.subr.bf16.mxu0 %v768
    %1090 = vmatpush2.bf16.msra.mxu0 %v767
    %1091 = vmatprep.subr.bf16.mxu0 %v764
    %1092 = vmatpush2.bf16.msra.mxu0 %v763
    %1093 = vmatprep.subr.bf16.mxu0 %v760
    %1094 = vmatpush2.bf16.msra.mxu0 %v759
    %1095 = vmatprep.mubr.bf16.mxu0 %v188
    %1096 = vmatmul.mubr.bf16.gmra.mxu0 %v187
    %v1097 = vpop.f32.mrf.mxu0
    %v1098 = vadd.f32 %v332, %v1097
    %v1099 = vpop.f32.mrf.mxu0
    %v1100 = vadd.f32 %v336, %v1099
    %v1101 = vpop.f32.mrf.mxu0
    %v1102 = vpop.f32.mrf.mxu0
    %1103 = vdwg.mxu0
    %1104 = vmatprep.subr.bf16.mxu0 %v820
    %1105 = vmatpush1.bf16.msra.mxu0 %v819
    %1106 = vmatprep.subr.bf16.mxu0 %v816
    %1107 = vmatpush1.bf16.msra.mxu0 %v815
    %1108 = vmatprep.subr.bf16.mxu0 %v812
    %1109 = vmatpush1.bf16.msra.mxu0 %v811
    %1110 = vmatprep.subr.bf16.mxu0 %v808
    %1111 = vmatpush1.bf16.msra.mxu0 %v807
    %1112 = vmatprep.subr.bf16.mxu0 %v804
    %1113 = vmatpush1.bf16.msra.mxu0 %v803
    %1114 = vmatprep.subr.bf16.mxu0 %v800
    %1115 = vmatpush1.bf16.msra.mxu0 %v799
    %1116 = vmatprep.subr.bf16.mxu0 %v796
    %1117 = vmatpush1.bf16.msra.mxu0 %v795
    %1118 = vmatprep.subr.bf16.mxu0 %v792
    %1119 = vmatpush1.bf16.msra.mxu0 %v791
    %1120 = vmatprep.subr.bf16.mxu0 %v852
    %1121 = vmatpush2.bf16.msra.mxu0 %v851
    %1122 = vmatprep.subr.bf16.mxu0 %v848
    %1123 = vmatpush2.bf16.msra.mxu0 %v847
    %1124 = vmatprep.subr.bf16.mxu0 %v844
    %1125 = vmatpush2.bf16.msra.mxu0 %v843
    %1126 = vmatprep.subr.bf16.mxu0 %v840
    %1127 = vmatpush2.bf16.msra.mxu0 %v839
    %1128 = vmatprep.subr.bf16.mxu0 %v836
    %1129 = vmatpush2.bf16.msra.mxu0 %v835
    %1130 = vmatprep.subr.bf16.mxu0 %v832
    %1131 = vmatpush2.bf16.msra.mxu0 %v831
    %1132 = vmatprep.subr.bf16.mxu0 %v828
    %1133 = vmatpush2.bf16.msra.mxu0 %v827
    %1134 = vmatprep.subr.bf16.mxu0 %v824
    %1135 = vmatpush2.bf16.msra.mxu0 %v823
    %1136 = vmatprep.mubr.bf16.mxu0 %v190
    %1137 = vmatmul.mubr.bf16.gmra.mxu0 %v189
    %v1138 = vpop.f32.mrf.mxu0
    %v1139 = vadd.f32 %v1098, %v1138
    %v1140 = vpop.f32.mrf.mxu0
    %v1141 = vadd.f32 %v1100, %v1140
    %v1142 = vpop.f32.mrf.mxu0
    %v1143 = vpop.f32.mrf.mxu0
    %1144 = vdwg.mxu0
    %v1145 = vmax.f32 %v1057, 0.0
    %v1146 = vmax.f32 %v1059, 0.0
    %v1147 = vmax.f32 %v1139, 0.0
    %v1148 = vmax.f32 %v1141, 0.0
    %v1149 = vpack.c.bf16 %v1145, %v1145
    %v1150 = vpack.c.bf16 %v1146, %v1146
    %v1151 = vpack.c.bf16 %v1147, %v1147
    %v1152 = vpack.c.bf16 %v1148, %v1148
    %v1153 = vld [vmem:[#allocation4] sm:$0xff]
    %v1154 = vld [vmem:[#allocation4 + $0x8] sm:$0xff]
    %v1155 = vld [vmem:[#allocation4 + $0x10] sm:$0xff]
    %v1156 = vld [vmem:[#allocation4 + $0x18] sm:$0xff]
    %v1157 = vld [vmem:[#allocation4 + $0x20] sm:$0xff]
    %v1158 = vld [vmem:[#allocation4 + $0x28] sm:$0xff]
    %v1159 = vld [vmem:[#allocation4 + $0x30] sm:$0xff]
    %v1160 = vld [vmem:[#allocation4 + $0x38] sm:$0xff]
    %v1161 = vld [vmem:[#allocation4 + $0x40] sm:$0xff]
    %v1162 = vld [vmem:[#allocation4 + $0x48] sm:$0xff]
    %v1163 = vld [vmem:[#allocation4 + $0x50] sm:$0xff]
    %v1164 = vld [vmem:[#allocation4 + $0x58] sm:$0xff]
    %v1165 = vld [vmem:[#allocation4 + $0x60] sm:$0xff]
    %v1166 = vld [vmem:[#allocation4 + $0x68] sm:$0xff]
    %v1167 = vld [vmem:[#allocation4 + $0x70] sm:$0xff]
    %v1168 = vld [vmem:[#allocation4 + $0x78] sm:$0xff]
    %v1169 = vld [vmem:[#allocation4 + $0x80] sm:$0xff]
    %v1170 = vld [vmem:[#allocation4 + $0x88] sm:$0xff]
    %v1171 = vld [vmem:[#allocation4 + $0x90] sm:$0xff]
    %v1172 = vld [vmem:[#allocation4 + $0x98] sm:$0xff]
    %v1173 = vld [vmem:[#allocation4 + $0xa0] sm:$0xff]
    %v1174 = vld [vmem:[#allocation4 + $0xa8] sm:$0xff]
    %v1175 = vld [vmem:[#allocation4 + $0xb0] sm:$0xff]
    %v1176 = vld [vmem:[#allocation4 + $0xb8] sm:$0xff]
    %v1177 = vld [vmem:[#allocation4 + $0xc0] sm:$0xff]
    %v1178 = vld [vmem:[#allocation4 + $0xc8] sm:$0xff]
    %v1179 = vld [vmem:[#allocation4 + $0xd0] sm:$0xff]
    %v1180 = vld [vmem:[#allocation4 + $0xd8] sm:$0xff]
    %v1181 = vld [vmem:[#allocation4 + $0xe0] sm:$0xff]
    %v1182 = vld [vmem:[#allocation4 + $0xe8] sm:$0xff]
    %v1183 = vld [vmem:[#allocation4 + $0xf0] sm:$0xff]
    %v1184 = vld [vmem:[#allocation4 + $0xf8] sm:$0xff]
    %v1185 = vld [vmem:[#allocation4 + $0x100] sm:$0xff]
    %v1186 = vld [vmem:[#allocation4 + $0x108] sm:$0xff]
    %v1187 = vld [vmem:[#allocation4 + $0x110] sm:$0xff]
    %v1188 = vld [vmem:[#allocation4 + $0x118] sm:$0xff]
    %v1189 = vld [vmem:[#allocation4 + $0x120] sm:$0xff]
    %v1190 = vld [vmem:[#allocation4 + $0x128] sm:$0xff]
    %v1191 = vld [vmem:[#allocation4 + $0x130] sm:$0xff]
    %v1192 = vld [vmem:[#allocation4 + $0x138] sm:$0xff]
    %v1193 = vld [vmem:[#allocation4 + $0x140] sm:$0xff]
    %v1194 = vld [vmem:[#allocation4 + $0x148] sm:$0xff]
    %v1195 = vld [vmem:[#allocation4 + $0x150] sm:$0xff]
    %v1196 = vld [vmem:[#allocation4 + $0x158] sm:$0xff]
    %v1197 = vld [vmem:[#allocation4 + $0x160] sm:$0xff]
    %v1198 = vld [vmem:[#allocation4 + $0x168] sm:$0xff]
    %v1199 = vld [vmem:[#allocation4 + $0x170] sm:$0xff]
    %v1200 = vld [vmem:[#allocation4 + $0x178] sm:$0xff]
    %v1201 = vld [vmem:[#allocation4 + $0x180] sm:$0xff]
    %v1202 = vld [vmem:[#allocation4 + $0x188] sm:$0xff]
    %v1203 = vld [vmem:[#allocation4 + $0x190] sm:$0xff]
    %v1204 = vld [vmem:[#allocation4 + $0x198] sm:$0xff]
    %v1205 = vld [vmem:[#allocation4 + $0x1a0] sm:$0xff]
    %v1206 = vld [vmem:[#allocation4 + $0x1a8] sm:$0xff]
    %v1207 = vld [vmem:[#allocation4 + $0x1b0] sm:$0xff]
    %v1208 = vld [vmem:[#allocation4 + $0x1b8] sm:$0xff]
    %v1209 = vld [vmem:[#allocation4 + $0x1c0] sm:$0xff]
    %v1210 = vld [vmem:[#allocation4 + $0x1c8] sm:$0xff]
    %v1211 = vld [vmem:[#allocation4 + $0x1d0] sm:$0xff]
    %v1212 = vld [vmem:[#allocation4 + $0x1d8] sm:$0xff]
    %v1213 = vld [vmem:[#allocation4 + $0x1e0] sm:$0xff]
    %v1214 = vld [vmem:[#allocation4 + $0x1e8] sm:$0xff]
    %v1215 = vld [vmem:[#allocation4 + $0x1f0] sm:$0xff]
    %v1216 = vld [vmem:[#allocation4 + $0x1f8] sm:$0xff]
    %v1217 = vld [vmem:[#allocation4 + $0x200] sm:$0xff]
    %v1218 = vld [vmem:[#allocation4 + $0x208] sm:$0xff]
    %v1219 = vld [vmem:[#allocation4 + $0x210] sm:$0xff]
    %v1220 = vld [vmem:[#allocation4 + $0x218] sm:$0xff]
    %v1221 = vld [vmem:[#allocation4 + $0x220] sm:$0xff]
    %v1222 = vld [vmem:[#allocation4 + $0x228] sm:$0xff]
    %v1223 = vld [vmem:[#allocation4 + $0x230] sm:$0xff]
    %v1224 = vld [vmem:[#allocation4 + $0x238] sm:$0xff]
    %v1225 = vld [vmem:[#allocation4 + $0x240] sm:$0xff]
    %v1226 = vld [vmem:[#allocation4 + $0x248] sm:$0xff]
    %v1227 = vld [vmem:[#allocation4 + $0x250] sm:$0xff]
    %v1228 = vld [vmem:[#allocation4 + $0x258] sm:$0xff]
    %v1229 = vld [vmem:[#allocation4 + $0x260] sm:$0xff]
    %v1230 = vld [vmem:[#allocation4 + $0x268] sm:$0xff]
    %v1231 = vld [vmem:[#allocation4 + $0x270] sm:$0xff]
    %v1232 = vld [vmem:[#allocation4 + $0x278] sm:$0xff]
    %v1233 = vld [vmem:[#allocation4 + $0x280] sm:$0xff]
    %v1234 = vld [vmem:[#allocation4 + $0x288] sm:$0xff]
    %v1235 = vld [vmem:[#allocation4 + $0x290] sm:$0xff]
    %v1236 = vld [vmem:[#allocation4 + $0x298] sm:$0xff]
    %v1237 = vld [vmem:[#allocation4 + $0x2a0] sm:$0xff]
    %v1238 = vld [vmem:[#allocation4 + $0x2a8] sm:$0xff]
    %v1239 = vld [vmem:[#allocation4 + $0x2b0] sm:$0xff]
    %v1240 = vld [vmem:[#allocation4 + $0x2b8] sm:$0xff]
    %v1241 = vld [vmem:[#allocation4 + $0x2c0] sm:$0xff]
    %v1242 = vld [vmem:[#allocation4 + $0x2c8] sm:$0xff]
    %v1243 = vld [vmem:[#allocation4 + $0x2d0] sm:$0xff]
    %v1244 = vld [vmem:[#allocation4 + $0x2d8] sm:$0xff]
    %v1245 = vld [vmem:[#allocation4 + $0x2e0] sm:$0xff]
    %v1246 = vld [vmem:[#allocation4 + $0x2e8] sm:$0xff]
    %v1247 = vld [vmem:[#allocation4 + $0x2f0] sm:$0xff]
    %v1248 = vld [vmem:[#allocation4 + $0x2f8] sm:$0xff]
    %v1249 = vld [vmem:[#allocation4 + $0x300] sm:$0xff]
    %v1250 = vld [vmem:[#allocation4 + $0x308] sm:$0xff]
    %v1251 = vld [vmem:[#allocation4 + $0x310] sm:$0xff]
    %v1252 = vld [vmem:[#allocation4 + $0x318] sm:$0xff]
    %v1253 = vld [vmem:[#allocation4 + $0x320] sm:$0xff]
    %v1254 = vld [vmem:[#allocation4 + $0x328] sm:$0xff]
    %v1255 = vld [vmem:[#allocation4 + $0x330] sm:$0xff]
    %v1256 = vld [vmem:[#allocation4 + $0x338] sm:$0xff]
    %v1257 = vld [vmem:[#allocation4 + $0x340] sm:$0xff]
    %v1258 = vld [vmem:[#allocation4 + $0x348] sm:$0xff]
    %v1259 = vld [vmem:[#allocation4 + $0x350] sm:$0xff]
    %v1260 = vld [vmem:[#allocation4 + $0x358] sm:$0xff]
    %v1261 = vld [vmem:[#allocation4 + $0x360] sm:$0xff]
    %v1262 = vld [vmem:[#allocation4 + $0x368] sm:$0xff]
    %v1263 = vld [vmem:[#allocation4 + $0x370] sm:$0xff]
    %v1264 = vld [vmem:[#allocation4 + $0x378] sm:$0xff]
    %v1265 = vld [vmem:[#allocation4 + $0x380] sm:$0xff]
    %v1266 = vld [vmem:[#allocation4 + $0x388] sm:$0xff]
    %v1267 = vld [vmem:[#allocation4 + $0x390] sm:$0xff]
    %v1268 = vld [vmem:[#allocation4 + $0x398] sm:$0xff]
    %v1269 = vld [vmem:[#allocation4 + $0x3a0] sm:$0xff]
    %v1270 = vld [vmem:[#allocation4 + $0x3a8] sm:$0xff]
    %v1271 = vld [vmem:[#allocation4 + $0x3b0] sm:$0xff]
    %v1272 = vld [vmem:[#allocation4 + $0x3b8] sm:$0xff]
    %v1273 = vld [vmem:[#allocation4 + $0x3c0] sm:$0xff]
    %v1274 = vld [vmem:[#allocation4 + $0x3c8] sm:$0xff]
    %v1275 = vld [vmem:[#allocation4 + $0x3d0] sm:$0xff]
    %v1276 = vld [vmem:[#allocation4 + $0x3d8] sm:$0xff]
    %v1277 = vld [vmem:[#allocation4 + $0x3e0] sm:$0xff]
    %v1278 = vld [vmem:[#allocation4 + $0x3e8] sm:$0xff]
    %v1279 = vld [vmem:[#allocation4 + $0x3f0] sm:$0xff]
    %v1280 = vld [vmem:[#allocation4 + $0x3f8] sm:$0xff]
    %v1281 = vld [vmem:[%s6] sm:$0xf]
    %v1283 = vlaneseq
    %v1284 = vshrl.u32 %v1283, 7
    %v1285 = vsub.s32 0, %v1284
    %v1286 = vrot.slane %v1281, %v1285
    %v1287 = vlaneseq
    %v1288 = vshrl.u32 %v1287, 7
    %v1289 = vsub.s32 1, %v1288
    %v1290 = vrot.slane %v1281, %v1289
    %v1291 = vlaneseq
    %v1292 = vshrl.u32 %v1291, 7
    %v1293 = vsub.s32 2, %v1292
    %v1294 = vrot.slane %v1281, %v1293
    %v1295 = vlaneseq
    %v1296 = vshrl.u32 %v1295, 7
    %v1297 = vsub.s32 3, %v1296
    %v1298 = vrot.slane %v1281, %v1297
    %v1431 = vunpack.c.l.b16 %v1153
    %v1432 = vunpack.c.h.b16 %v1153
    %v1433 = vunpack.c.l.b16 %v1154
    %v1434 = vunpack.c.h.b16 %v1154
    %v1435 = vunpack.c.l.b16 %v1155
    %v1436 = vunpack.c.h.b16 %v1155
    %v1437 = vunpack.c.l.b16 %v1156
    %v1438 = vunpack.c.h.b16 %v1156
    %v1439 = vunpack.c.l.b16 %v1157
    %v1440 = vunpack.c.h.b16 %v1157
    %v1441 = vunpack.c.l.b16 %v1158
    %v1442 = vunpack.c.h.b16 %v1158
    %v1443 = vunpack.c.l.b16 %v1159
    %v1444 = vunpack.c.h.b16 %v1159
    %v1445 = vunpack.c.l.b16 %v1160
    %v1446 = vunpack.c.h.b16 %v1160
    %v1447 = vunpack.c.l.b16 %v1161
    %v1448 = vunpack.c.h.b16 %v1161
    %v1449 = vunpack.c.l.b16 %v1162
    %v1450 = vunpack.c.h.b16 %v1162
    %v1451 = vunpack.c.l.b16 %v1163
    %v1452 = vunpack.c.h.b16 %v1163
    %v1453 = vunpack.c.l.b16 %v1164
    %v1454 = vunpack.c.h.b16 %v1164
    %v1455 = vunpack.c.l.b16 %v1165
    %v1456 = vunpack.c.h.b16 %v1165
    %v1457 = vunpack.c.l.b16 %v1166
    %v1458 = vunpack.c.h.b16 %v1166
    %v1459 = vunpack.c.l.b16 %v1167
    %v1460 = vunpack.c.h.b16 %v1167
    %v1461 = vunpack.c.l.b16 %v1168
    %v1462 = vunpack.c.h.b16 %v1168
    %v1463 = vunpack.c.l.b16 %v1169
    %v1464 = vunpack.c.h.b16 %v1169
    %v1465 = vunpack.c.l.b16 %v1170
    %v1466 = vunpack.c.h.b16 %v1170
    %v1467 = vunpack.c.l.b16 %v1171
    %v1468 = vunpack.c.h.b16 %v1171
    %v1469 = vunpack.c.l.b16 %v1172
    %v1470 = vunpack.c.h.b16 %v1172
    %v1471 = vunpack.c.l.b16 %v1173
    %v1472 = vunpack.c.h.b16 %v1173
    %v1473 = vunpack.c.l.b16 %v1174
    %v1474 = vunpack.c.h.b16 %v1174
    %v1475 = vunpack.c.l.b16 %v1175
    %v1476 = vunpack.c.h.b16 %v1175
    %v1477 = vunpack.c.l.b16 %v1176
    %v1478 = vunpack.c.h.b16 %v1176
    %v1479 = vunpack.c.l.b16 %v1177
    %v1480 = vunpack.c.h.b16 %v1177
    %v1481 = vunpack.c.l.b16 %v1178
    %v1482 = vunpack.c.h.b16 %v1178
    %v1483 = vunpack.c.l.b16 %v1179
    %v1484 = vunpack.c.h.b16 %v1179
    %v1485 = vunpack.c.l.b16 %v1180
    %v1486 = vunpack.c.h.b16 %v1180
    %v1487 = vunpack.c.l.b16 %v1181
    %v1488 = vunpack.c.h.b16 %v1181
    %v1489 = vunpack.c.l.b16 %v1182
    %v1490 = vunpack.c.h.b16 %v1182
    %v1491 = vunpack.c.l.b16 %v1183
    %v1492 = vunpack.c.h.b16 %v1183
    %v1493 = vunpack.c.l.b16 %v1184
    %v1494 = vunpack.c.h.b16 %v1184
    %v1495 = vunpack.c.l.b16 %v1185
    %v1496 = vunpack.c.h.b16 %v1185
    %v1497 = vunpack.c.l.b16 %v1186
    %v1498 = vunpack.c.h.b16 %v1186
    %v1499 = vunpack.c.l.b16 %v1187
    %v1500 = vunpack.c.h.b16 %v1187
    %v1501 = vunpack.c.l.b16 %v1188
    %v1502 = vunpack.c.h.b16 %v1188
    %v1503 = vunpack.c.l.b16 %v1189
    %v1504 = vunpack.c.h.b16 %v1189
    %v1505 = vunpack.c.l.b16 %v1190
    %v1506 = vunpack.c.h.b16 %v1190
    %v1507 = vunpack.c.l.b16 %v1191
    %v1508 = vunpack.c.h.b16 %v1191
    %v1509 = vunpack.c.l.b16 %v1192
    %v1510 = vunpack.c.h.b16 %v1192
    %v1511 = vunpack.c.l.b16 %v1193
    %v1512 = vunpack.c.h.b16 %v1193
    %v1513 = vunpack.c.l.b16 %v1194
    %v1514 = vunpack.c.h.b16 %v1194
    %v1515 = vunpack.c.l.b16 %v1195
    %v1516 = vunpack.c.h.b16 %v1195
    %v1517 = vunpack.c.l.b16 %v1196
    %v1518 = vunpack.c.h.b16 %v1196
    %v1519 = vunpack.c.l.b16 %v1197
    %v1520 = vunpack.c.h.b16 %v1197
    %v1521 = vunpack.c.l.b16 %v1198
    %v1522 = vunpack.c.h.b16 %v1198
    %v1523 = vunpack.c.l.b16 %v1199
    %v1524 = vunpack.c.h.b16 %v1199
    %v1525 = vunpack.c.l.b16 %v1200
    %v1526 = vunpack.c.h.b16 %v1200
    %v1527 = vunpack.c.l.b16 %v1201
    %v1528 = vunpack.c.h.b16 %v1201
    %v1529 = vunpack.c.l.b16 %v1202
    %v1530 = vunpack.c.h.b16 %v1202
    %v1531 = vunpack.c.l.b16 %v1203
    %v1532 = vunpack.c.h.b16 %v1203
    %v1533 = vunpack.c.l.b16 %v1204
    %v1534 = vunpack.c.h.b16 %v1204
    %v1535 = vunpack.c.l.b16 %v1205
    %v1536 = vunpack.c.h.b16 %v1205
    %v1537 = vunpack.c.l.b16 %v1206
    %v1538 = vunpack.c.h.b16 %v1206
    %v1539 = vunpack.c.l.b16 %v1207
    %v1540 = vunpack.c.h.b16 %v1207
    %v1541 = vunpack.c.l.b16 %v1208
    %v1542 = vunpack.c.h.b16 %v1208
    %v1543 = vunpack.c.l.b16 %v1209
    %v1544 = vunpack.c.h.b16 %v1209
    %v1545 = vunpack.c.l.b16 %v1210
    %v1546 = vunpack.c.h.b16 %v1210
    %v1547 = vunpack.c.l.b16 %v1211
    %v1548 = vunpack.c.h.b16 %v1211
    %v1549 = vunpack.c.l.b16 %v1212
    %v1550 = vunpack.c.h.b16 %v1212
    %v1551 = vunpack.c.l.b16 %v1213
    %v1552 = vunpack.c.h.b16 %v1213
    %v1553 = vunpack.c.l.b16 %v1214
    %v1554 = vunpack.c.h.b16 %v1214
    %v1555 = vunpack.c.l.b16 %v1215
    %v1556 = vunpack.c.h.b16 %v1215
    %v1557 = vunpack.c.l.b16 %v1216
    %v1558 = vunpack.c.h.b16 %v1216
    %v1559 = vunpack.c.l.b16 %v1217
    %v1560 = vunpack.c.h.b16 %v1217
    %v1561 = vunpack.c.l.b16 %v1218
    %v1562 = vunpack.c.h.b16 %v1218
    %v1563 = vunpack.c.l.b16 %v1219
    %v1564 = vunpack.c.h.b16 %v1219
    %v1565 = vunpack.c.l.b16 %v1220
    %v1566 = vunpack.c.h.b16 %v1220
    %v1567 = vunpack.c.l.b16 %v1221
    %v1568 = vunpack.c.h.b16 %v1221
    %v1569 = vunpack.c.l.b16 %v1222
    %v1570 = vunpack.c.h.b16 %v1222
    %v1571 = vunpack.c.l.b16 %v1223
    %v1572 = vunpack.c.h.b16 %v1223
    %v1573 = vunpack.c.l.b16 %v1224
    %v1574 = vunpack.c.h.b16 %v1224
    %v1575 = vunpack.c.l.b16 %v1225
    %v1576 = vunpack.c.h.b16 %v1225
    %v1577 = vunpack.c.l.b16 %v1226
    %v1578 = vunpack.c.h.b16 %v1226
    %v1579 = vunpack.c.l.b16 %v1227
    %v1580 = vunpack.c.h.b16 %v1227
    %v1581 = vunpack.c.l.b16 %v1228
    %v1582 = vunpack.c.h.b16 %v1228
    %v1583 = vunpack.c.l.b16 %v1229
    %v1584 = vunpack.c.h.b16 %v1229
    %v1585 = vunpack.c.l.b16 %v1230
    %v1586 = vunpack.c.h.b16 %v1230
    %v1587 = vunpack.c.l.b16 %v1231
    %v1588 = vunpack.c.h.b16 %v1231
    %v1589 = vunpack.c.l.b16 %v1232
    %v1590 = vunpack.c.h.b16 %v1232
    %v1591 = vunpack.c.l.b16 %v1233
    %v1592 = vunpack.c.h.b16 %v1233
    %v1593 = vunpack.c.l.b16 %v1234
    %v1594 = vunpack.c.h.b16 %v1234
    %v1595 = vunpack.c.l.b16 %v1235
    %v1596 = vunpack.c.h.b16 %v1235
    %v1597 = vunpack.c.l.b16 %v1236
    %v1598 = vunpack.c.h.b16 %v1236
    %v1599 = vunpack.c.l.b16 %v1237
    %v1600 = vunpack.c.h.b16 %v1237
    %v1601 = vunpack.c.l.b16 %v1238
    %v1602 = vunpack.c.h.b16 %v1238
    %v1603 = vunpack.c.l.b16 %v1239
    %v1604 = vunpack.c.h.b16 %v1239
    %v1605 = vunpack.c.l.b16 %v1240
    %v1606 = vunpack.c.h.b16 %v1240
    %v1607 = vunpack.c.l.b16 %v1241
    %v1608 = vunpack.c.h.b16 %v1241
    %v1609 = vunpack.c.l.b16 %v1242
    %v1610 = vunpack.c.h.b16 %v1242
    %v1611 = vunpack.c.l.b16 %v1243
    %v1612 = vunpack.c.h.b16 %v1243
    %v1613 = vunpack.c.l.b16 %v1244
    %v1614 = vunpack.c.h.b16 %v1244
    %v1615 = vunpack.c.l.b16 %v1245
    %v1616 = vunpack.c.h.b16 %v1245
    %v1617 = vunpack.c.l.b16 %v1246
    %v1618 = vunpack.c.h.b16 %v1246
    %v1619 = vunpack.c.l.b16 %v1247
    %v1620 = vunpack.c.h.b16 %v1247
    %v1621 = vunpack.c.l.b16 %v1248
    %v1622 = vunpack.c.h.b16 %v1248
    %v1623 = vunpack.c.l.b16 %v1249
    %v1624 = vunpack.c.h.b16 %v1249
    %v1625 = vunpack.c.l.b16 %v1250
    %v1626 = vunpack.c.h.b16 %v1250
    %v1627 = vunpack.c.l.b16 %v1251
    %v1628 = vunpack.c.h.b16 %v1251
    %v1629 = vunpack.c.l.b16 %v1252
    %v1630 = vunpack.c.h.b16 %v1252
    %v1631 = vunpack.c.l.b16 %v1253
    %v1632 = vunpack.c.h.b16 %v1253
    %v1633 = vunpack.c.l.b16 %v1254
    %v1634 = vunpack.c.h.b16 %v1254
    %v1635 = vunpack.c.l.b16 %v1255
    %v1636 = vunpack.c.h.b16 %v1255
    %v1637 = vunpack.c.l.b16 %v1256
    %v1638 = vunpack.c.h.b16 %v1256
    %v1639 = vunpack.c.l.b16 %v1257
    %v1640 = vunpack.c.h.b16 %v1257
    %v1641 = vunpack.c.l.b16 %v1258
    %v1642 = vunpack.c.h.b16 %v1258
    %v1643 = vunpack.c.l.b16 %v1259
    %v1644 = vunpack.c.h.b16 %v1259
    %v1645 = vunpack.c.l.b16 %v1260
    %v1646 = vunpack.c.h.b16 %v1260
    %v1647 = vunpack.c.l.b16 %v1261
    %v1648 = vunpack.c.h.b16 %v1261
    %v1649 = vunpack.c.l.b16 %v1262
    %v1650 = vunpack.c.h.b16 %v1262
    %v1651 = vunpack.c.l.b16 %v1263
    %v1652 = vunpack.c.h.b16 %v1263
    %v1653 = vunpack.c.l.b16 %v1264
    %v1654 = vunpack.c.h.b16 %v1264
    %v1655 = vunpack.c.l.b16 %v1265
    %v1656 = vunpack.c.h.b16 %v1265
    %v1657 = vunpack.c.l.b16 %v1266
    %v1658 = vunpack.c.h.b16 %v1266
    %v1659 = vunpack.c.l.b16 %v1267
    %v1660 = vunpack.c.h.b16 %v1267
    %v1661 = vunpack.c.l.b16 %v1268
    %v1662 = vunpack.c.h.b16 %v1268
    %v1663 = vunpack.c.l.b16 %v1269
    %v1664 = vunpack.c.h.b16 %v1269
    %v1665 = vunpack.c.l.b16 %v1270
    %v1666 = vunpack.c.h.b16 %v1270
    %v1667 = vunpack.c.l.b16 %v1271
    %v1668 = vunpack.c.h.b16 %v1271
    %v1669 = vunpack.c.l.b16 %v1272
    %v1670 = vunpack.c.h.b16 %v1272
    %v1671 = vunpack.c.l.b16 %v1273
    %v1672 = vunpack.c.h.b16 %v1273
    %v1673 = vunpack.c.l.b16 %v1274
    %v1674 = vunpack.c.h.b16 %v1274
    %v1675 = vunpack.c.l.b16 %v1275
    %v1676 = vunpack.c.h.b16 %v1275
    %v1677 = vunpack.c.l.b16 %v1276
    %v1678 = vunpack.c.h.b16 %v1276
    %v1679 = vunpack.c.l.b16 %v1277
    %v1680 = vunpack.c.h.b16 %v1277
    %v1681 = vunpack.c.l.b16 %v1278
    %v1682 = vunpack.c.h.b16 %v1278
    %v1683 = vunpack.c.l.b16 %v1279
    %v1684 = vunpack.c.h.b16 %v1279
    %v1685 = vunpack.c.l.b16 %v1280
    %v1686 = vunpack.c.h.b16 %v1280
    %v1687 = vpack.c.b16 %v1435, %v1431
    %v1688 = vpack.c.b16 %v1436, %v1432
    %v1689 = vpack.c.b16 %v1437, %v1433
    %v1690 = vpack.c.b16 %v1438, %v1434
    %v1691 = vpack.c.b16 %v1443, %v1439
    %v1692 = vpack.c.b16 %v1444, %v1440
    %v1693 = vpack.c.b16 %v1445, %v1441
    %v1694 = vpack.c.b16 %v1446, %v1442
    %v1695 = vpack.c.b16 %v1451, %v1447
    %v1696 = vpack.c.b16 %v1452, %v1448
    %v1697 = vpack.c.b16 %v1453, %v1449
    %v1698 = vpack.c.b16 %v1454, %v1450
    %v1699 = vpack.c.b16 %v1459, %v1455
    %v1700 = vpack.c.b16 %v1460, %v1456
    %v1701 = vpack.c.b16 %v1461, %v1457
    %v1702 = vpack.c.b16 %v1462, %v1458
    %v1703 = vpack.c.b16 %v1467, %v1463
    %v1704 = vpack.c.b16 %v1468, %v1464
    %v1705 = vpack.c.b16 %v1469, %v1465
    %v1706 = vpack.c.b16 %v1470, %v1466
    %v1707 = vpack.c.b16 %v1475, %v1471
    %v1708 = vpack.c.b16 %v1476, %v1472
    %v1709 = vpack.c.b16 %v1477, %v1473
    %v1710 = vpack.c.b16 %v1478, %v1474
    %v1711 = vpack.c.b16 %v1483, %v1479
    %v1712 = vpack.c.b16 %v1484, %v1480
    %v1713 = vpack.c.b16 %v1485, %v1481
    %v1714 = vpack.c.b16 %v1486, %v1482
    %v1715 = vpack.c.b16 %v1491, %v1487
    %v1716 = vpack.c.b16 %v1492, %v1488
    %v1717 = vpack.c.b16 %v1493, %v1489
    %v1718 = vpack.c.b16 %v1494, %v1490
    %v1719 = vpack.c.b16 %v1499, %v1495
    %v1720 = vpack.c.b16 %v1500, %v1496
    %v1721 = vpack.c.b16 %v1501, %v1497
    %v1722 = vpack.c.b16 %v1502, %v1498
    %v1723 = vpack.c.b16 %v1507, %v1503
    %v1724 = vpack.c.b16 %v1508, %v1504
    %v1725 = vpack.c.b16 %v1509, %v1505
    %v1726 = vpack.c.b16 %v1510, %v1506
    %v1727 = vpack.c.b16 %v1515, %v1511
    %v1728 = vpack.c.b16 %v1516, %v1512
    %v1729 = vpack.c.b16 %v1517, %v1513
    %v1730 = vpack.c.b16 %v1518, %v1514
    %v1731 = vpack.c.b16 %v1523, %v1519
    %v1732 = vpack.c.b16 %v1524, %v1520
    %v1733 = vpack.c.b16 %v1525, %v1521
    %v1734 = vpack.c.b16 %v1526, %v1522
    %v1735 = vpack.c.b16 %v1531, %v1527
    %v1736 = vpack.c.b16 %v1532, %v1528
    %v1737 = vpack.c.b16 %v1533, %v1529
    %v1738 = vpack.c.b16 %v1534, %v1530
    %v1739 = vpack.c.b16 %v1539, %v1535
    %v1740 = vpack.c.b16 %v1540, %v1536
    %v1741 = vpack.c.b16 %v1541, %v1537
    %v1742 = vpack.c.b16 %v1542, %v1538
    %v1743 = vpack.c.b16 %v1547, %v1543
    %v1744 = vpack.c.b16 %v1548, %v1544
    %v1745 = vpack.c.b16 %v1549, %v1545
    %v1746 = vpack.c.b16 %v1550, %v1546
    %v1747 = vpack.c.b16 %v1555, %v1551
    %v1748 = vpack.c.b16 %v1556, %v1552
    %v1749 = vpack.c.b16 %v1557, %v1553
    %v1750 = vpack.c.b16 %v1558, %v1554
    %v1751 = vpack.c.b16 %v1563, %v1559
    %v1752 = vpack.c.b16 %v1564, %v1560
    %v1753 = vpack.c.b16 %v1565, %v1561
    %v1754 = vpack.c.b16 %v1566, %v1562
    %v1755 = vpack.c.b16 %v1571, %v1567
    %v1756 = vpack.c.b16 %v1572, %v1568
    %v1757 = vpack.c.b16 %v1573, %v1569
    %v1758 = vpack.c.b16 %v1574, %v1570
    %v1759 = vpack.c.b16 %v1579, %v1575
    %v1760 = vpack.c.b16 %v1580, %v1576
    %v1761 = vpack.c.b16 %v1581, %v1577
    %v1762 = vpack.c.b16 %v1582, %v1578
    %v1763 = vpack.c.b16 %v1587, %v1583
    %v1764 = vpack.c.b16 %v1588, %v1584
    %v1765 = vpack.c.b16 %v1589, %v1585
    %v1766 = vpack.c.b16 %v1590, %v1586
    %v1767 = vpack.c.b16 %v1595, %v1591
    %v1768 = vpack.c.b16 %v1596, %v1592
    %v1769 = vpack.c.b16 %v1597, %v1593
    %v1770 = vpack.c.b16 %v1598, %v1594
    %v1771 = vpack.c.b16 %v1603, %v1599
    %v1772 = vpack.c.b16 %v1604, %v1600
    %v1773 = vpack.c.b16 %v1605, %v1601
    %v1774 = vpack.c.b16 %v1606, %v1602
    %v1775 = vpack.c.b16 %v1611, %v1607
    %v1776 = vpack.c.b16 %v1612, %v1608
    %v1777 = vpack.c.b16 %v1613, %v1609
    %v1778 = vpack.c.b16 %v1614, %v1610
    %v1779 = vpack.c.b16 %v1619, %v1615
    %v1780 = vpack.c.b16 %v1620, %v1616
    %v1781 = vpack.c.b16 %v1621, %v1617
    %v1782 = vpack.c.b16 %v1622, %v1618
    %v1783 = vpack.c.b16 %v1627, %v1623
    %v1784 = vpack.c.b16 %v1628, %v1624
    %v1785 = vpack.c.b16 %v1629, %v1625
    %v1786 = vpack.c.b16 %v1630, %v1626
    %v1787 = vpack.c.b16 %v1635, %v1631
    %v1788 = vpack.c.b16 %v1636, %v1632
    %v1789 = vpack.c.b16 %v1637, %v1633
    %v1790 = vpack.c.b16 %v1638, %v1634
    %v1791 = vpack.c.b16 %v1643, %v1639
    %v1792 = vpack.c.b16 %v1644, %v1640
    %v1793 = vpack.c.b16 %v1645, %v1641
    %v1794 = vpack.c.b16 %v1646, %v1642
    %v1795 = vpack.c.b16 %v1651, %v1647
    %v1796 = vpack.c.b16 %v1652, %v1648
    %v1797 = vpack.c.b16 %v1653, %v1649
    %v1798 = vpack.c.b16 %v1654, %v1650
    %v1799 = vpack.c.b16 %v1659, %v1655
    %v1800 = vpack.c.b16 %v1660, %v1656
    %v1801 = vpack.c.b16 %v1661, %v1657
    %v1802 = vpack.c.b16 %v1662, %v1658
    %v1803 = vpack.c.b16 %v1667, %v1663
    %v1804 = vpack.c.b16 %v1668, %v1664
    %v1805 = vpack.c.b16 %v1669, %v1665
    %v1806 = vpack.c.b16 %v1670, %v1666
    %v1807 = vpack.c.b16 %v1675, %v1671
    %v1808 = vpack.c.b16 %v1676, %v1672
    %v1809 = vpack.c.b16 %v1677, %v1673
    %v1810 = vpack.c.b16 %v1678, %v1674
    %v1811 = vpack.c.b16 %v1683, %v1679
    %v1812 = vpack.c.b16 %v1684, %v1680
    %v1813 = vpack.c.b16 %v1685, %v1681
    %v1814 = vpack.c.b16 %v1686, %v1682
    %1943 = vmatprep.subr.bf16.mxu0 %v1716
    %1944 = vmatpush1.bf16.msra.mxu0 %v1715
    %1945 = vmatprep.subr.bf16.mxu0 %v1712
    %1946 = vmatpush1.bf16.msra.mxu0 %v1711
    %1947 = vmatprep.subr.bf16.mxu0 %v1708
    %1948 = vmatpush1.bf16.msra.mxu0 %v1707
    %1949 = vmatprep.subr.bf16.mxu0 %v1704
    %1950 = vmatpush1.bf16.msra.mxu0 %v1703
    %1951 = vmatprep.subr.bf16.mxu0 %v1700
    %1952 = vmatpush1.bf16.msra.mxu0 %v1699
    %1953 = vmatprep.subr.bf16.mxu0 %v1696
    %1954 = vmatpush1.bf16.msra.mxu0 %v1695
    %1955 = vmatprep.subr.bf16.mxu0 %v1692
    %1956 = vmatpush1.bf16.msra.mxu0 %v1691
    %1957 = vmatprep.subr.bf16.mxu0 %v1688
    %1958 = vmatpush1.bf16.msra.mxu0 %v1687
    %1959 = vmatprep.subr.bf16.mxu0 %v1748
    %1960 = vmatpush2.bf16.msra.mxu0 %v1747
    %1961 = vmatprep.subr.bf16.mxu0 %v1744
    %1962 = vmatpush2.bf16.msra.mxu0 %v1743
    %1963 = vmatprep.subr.bf16.mxu0 %v1740
    %1964 = vmatpush2.bf16.msra.mxu0 %v1739
    %1965 = vmatprep.subr.bf16.mxu0 %v1736
    %1966 = vmatpush2.bf16.msra.mxu0 %v1735
    %1967 = vmatprep.subr.bf16.mxu0 %v1732
    %1968 = vmatpush2.bf16.msra.mxu0 %v1731
    %1969 = vmatprep.subr.bf16.mxu0 %v1728
    %1970 = vmatpush2.bf16.msra.mxu0 %v1727
    %1971 = vmatprep.subr.bf16.mxu0 %v1724
    %1972 = vmatpush2.bf16.msra.mxu0 %v1723
    %1973 = vmatprep.subr.bf16.mxu0 %v1720
    %1974 = vmatpush2.bf16.msra.mxu0 %v1719
    %1975 = vmatprep.mubr.bf16.mxu0 %v1150
    %1976 = vmatmul.mubr.bf16.gmra.mxu0 %v1149
    %v1977 = vpop.f32.mrf.mxu0
    %v1978 = vadd.f32 %v1286, %v1977
    %v1979 = vpop.f32.mrf.mxu0
    %v1980 = vadd.f32 %v1290, %v1979
    %v1981 = vpop.f32.mrf.mxu0
    %v1982 = vpop.f32.mrf.mxu0
    %1983 = vdwg.mxu0
    %1984 = vmatprep.subr.bf16.mxu0 %v1780
    %1985 = vmatpush1.bf16.msra.mxu0 %v1779
    %1986 = vmatprep.subr.bf16.mxu0 %v1776
    %1987 = vmatpush1.bf16.msra.mxu0 %v1775
    %1988 = vmatprep.subr.bf16.mxu0 %v1772
    %1989 = vmatpush1.bf16.msra.mxu0 %v1771
    %1990 = vmatprep.subr.bf16.mxu0 %v1768
    %1991 = vmatpush1.bf16.msra.mxu0 %v1767
    %1992 = vmatprep.subr.bf16.mxu0 %v1764
    %1993 = vmatpush1.bf16.msra.mxu0 %v1763
    %1994 = vmatprep.subr.bf16.mxu0 %v1760
    %1995 = vmatpush1.bf16.msra.mxu0 %v1759
    %1996 = vmatprep.subr.bf16.mxu0 %v1756
    %1997 = vmatpush1.bf16.msra.mxu0 %v1755
    %1998 = vmatprep.subr.bf16.mxu0 %v1752
    %1999 = vmatpush1.bf16.msra.mxu0 %v1751
    %2000 = vmatprep.subr.bf16.mxu0 %v1812
    %2001 = vmatpush2.bf16.msra.mxu0 %v1811
    %2002 = vmatprep.subr.bf16.mxu0 %v1808
    %2003 = vmatpush2.bf16.msra.mxu0 %v1807
    %2004 = vmatprep.subr.bf16.mxu0 %v1804
    %2005 = vmatpush2.bf16.msra.mxu0 %v1803
    %2006 = vmatprep.subr.bf16.mxu0 %v1800
    %2007 = vmatpush2.bf16.msra.mxu0 %v1799
    %2008 = vmatprep.subr.bf16.mxu0 %v1796
    %2009 = vmatpush2.bf16.msra.mxu0 %v1795
    %2010 = vmatprep.subr.bf16.mxu0 %v1792
    %2011 = vmatpush2.bf16.msra.mxu0 %v1791
    %2012 = vmatprep.subr.bf16.mxu0 %v1788
    %2013 = vmatpush2.bf16.msra.mxu0 %v1787
    %2014 = vmatprep.subr.bf16.mxu0 %v1784
    %2015 = vmatpush2.bf16.msra.mxu0 %v1783
    %2016 = vmatprep.mubr.bf16.mxu0 %v1152
    %2017 = vmatmul.mubr.bf16.gmra.mxu0 %v1151
    %v2018 = vpop.f32.mrf.mxu0
    %v2019 = vadd.f32 %v1978, %v2018
    %v2020 = vpop.f32.mrf.mxu0
    %v2021 = vadd.f32 %v1980, %v2020
    %v2022 = vpop.f32.mrf.mxu0
    %v2023 = vpop.f32.mrf.mxu0
    %2024 = vdwg.mxu0
    %2025 = vmatprep.subr.bf16.mxu0 %v1718
    %2026 = vmatpush1.bf16.msra.mxu0 %v1717
    %2027 = vmatprep.subr.bf16.mxu0 %v1714
    %2028 = vmatpush1.bf16.msra.mxu0 %v1713
    %2029 = vmatprep.subr.bf16.mxu0 %v1710
    %2030 = vmatpush1.bf16.msra.mxu0 %v1709
    %2031 = vmatprep.subr.bf16.mxu0 %v1706
    %2032 = vmatpush1.bf16.msra.mxu0 %v1705
    %2033 = vmatprep.subr.bf16.mxu0 %v1702
    %2034 = vmatpush1.bf16.msra.mxu0 %v1701
    %2035 = vmatprep.subr.bf16.mxu0 %v1698
    %2036 = vmatpush1.bf16.msra.mxu0 %v1697
    %2037 = vmatprep.subr.bf16.mxu0 %v1694
    %2038 = vmatpush1.bf16.msra.mxu0 %v1693
    %2039 = vmatprep.subr.bf16.mxu0 %v1690
    %2040 = vmatpush1.bf16.msra.mxu0 %v1689
    %2041 = vmatprep.subr.bf16.mxu0 %v1750
    %2042 = vmatpush2.bf16.msra.mxu0 %v1749
    %2043 = vmatprep.subr.bf16.mxu0 %v1746
    %2044 = vmatpush2.bf16.msra.mxu0 %v1745
    %2045 = vmatprep.subr.bf16.mxu0 %v1742
    %2046 = vmatpush2.bf16.msra.mxu0 %v1741
    %2047 = vmatprep.subr.bf16.mxu0 %v1738
    %2048 = vmatpush2.bf16.msra.mxu0 %v1737
    %2049 = vmatprep.subr.bf16.mxu0 %v1734
    %2050 = vmatpush2.bf16.msra.mxu0 %v1733
    %2051 = vmatprep.subr.bf16.mxu0 %v1730
    %2052 = vmatpush2.bf16.msra.mxu0 %v1729
    %2053 = vmatprep.subr.bf16.mxu0 %v1726
    %2054 = vmatpush2.bf16.msra.mxu0 %v1725
    %2055 = vmatprep.subr.bf16.mxu0 %v1722
    %2056 = vmatpush2.bf16.msra.mxu0 %v1721
    %2057 = vmatprep.mubr.bf16.mxu0 %v1150
    %2058 = vmatmul.mubr.bf16.gmra.mxu0 %v1149
    %v2059 = vpop.f32.mrf.mxu0
    %v2060 = vadd.f32 %v1294, %v2059
    %v2061 = vpop.f32.mrf.mxu0
    %v2062 = vadd.f32 %v1298, %v2061
    %v2063 = vpop.f32.mrf.mxu0
    %v2064 = vpop.f32.mrf.mxu0
    %2065 = vdwg.mxu0
    %2066 = vmatprep.subr.bf16.mxu0 %v1782
    %2067 = vmatpush1.bf16.msra.mxu0 %v1781
    %2068 = vmatprep.subr.bf16.mxu0 %v1778
    %2069 = vmatpush1.bf16.msra.mxu0 %v1777
    %2070 = vmatprep.subr.bf16.mxu0 %v1774
    %2071 = vmatpush1.bf16.msra.mxu0 %v1773
    %2072 = vmatprep.subr.bf16.mxu0 %v1770
    %2073 = vmatpush1.bf16.msra.mxu0 %v1769
    %2074 = vmatprep.subr.bf16.mxu0 %v1766
    %2075 = vmatpush1.bf16.msra.mxu0 %v1765
    %2076 = vmatprep.subr.bf16.mxu0 %v1762
    %2077 = vmatpush1.bf16.msra.mxu0 %v1761
    %2078 = vmatprep.subr.bf16.mxu0 %v1758
    %2079 = vmatpush1.bf16.msra.mxu0 %v1757
    %2080 = vmatprep.subr.bf16.mxu0 %v1754
    %2081 = vmatpush1.bf16.msra.mxu0 %v1753
    %2082 = vmatprep.subr.bf16.mxu0 %v1814
    %2083 = vmatpush2.bf16.msra.mxu0 %v1813
    %2084 = vmatprep.subr.bf16.mxu0 %v1810
    %2085 = vmatpush2.bf16.msra.mxu0 %v1809
    %2086 = vmatprep.subr.bf16.mxu0 %v1806
    %2087 = vmatpush2.bf16.msra.mxu0 %v1805
    %2088 = vmatprep.subr.bf16.mxu0 %v1802
    %2089 = vmatpush2.bf16.msra.mxu0 %v1801
    %2090 = vmatprep.subr.bf16.mxu0 %v1798
    %2091 = vmatpush2.bf16.msra.mxu0 %v1797
    %2092 = vmatprep.subr.bf16.mxu0 %v1794
    %2093 = vmatpush2.bf16.msra.mxu0 %v1793
    %2094 = vmatprep.subr.bf16.mxu0 %v1790
    %2095 = vmatpush2.bf16.msra.mxu0 %v1789
    %2096 = vmatprep.subr.bf16.mxu0 %v1786
    %2097 = vmatpush2.bf16.msra.mxu0 %v1785
    %2098 = vmatprep.mubr.bf16.mxu0 %v1152
    %2099 = vmatmul.mubr.bf16.gmra.mxu0 %v1151
    %v2100 = vpop.f32.mrf.mxu0
    %v2101 = vadd.f32 %v2060, %v2100
    %v2102 = vpop.f32.mrf.mxu0
    %v2103 = vadd.f32 %v2062, %v2102
    %v2104 = vpop.f32.mrf.mxu0
    %v2105 = vpop.f32.mrf.mxu0
    %2106 = vdwg.mxu0
    %v2107 = vmax.f32 %v2019, 0.0
    %v2108 = vmax.f32 %v2021, 0.0
    %v2109 = vmax.f32 %v2101, 0.0
    %v2110 = vmax.f32 %v2103, 0.0
    %v2111 = vld [vmem:[%s8] sm:$0x1]
    %v2112 = vld [vmem:[%s7] sm:$0xf]
    %v2113 = vunpack.c.l.bf16 %v2112
    %v2115 = vlaneseq
    %v2116 = vshrl.u32 %v2115, 7
    %v2117 = vsub.s32 0, %v2116
    %v2118 = vrot.slane %v2113, %v2117
    %v2119 = vlaneseq
    %v2120 = vshrl.u32 %v2119, 7
    %v2121 = vsub.s32 2, %v2120
    %v2122 = vrot.slane %v2113, %v2121
    %v2123 = vlaneseq
    %v2124 = vshrl.u32 %v2123, 7
    %v2125 = vsub.s32 4, %v2124
    %v2126 = vrot.slane %v2113, %v2125
    %v2127 = vlaneseq
    %v2128 = vshrl.u32 %v2127, 7
    %v2129 = vsub.s32 6, %v2128
    %v2130 = vrot.slane %v2113, %v2129
    %v2135 = vlaneseq
    %v2136 = vshrl.u32 %v2135, 7
    %v2137 = vsub.s32 0, %v2136
    %v2138 = vrot.slane %v2118, %v2137
    %v2139 = vlaneseq
    %v2140 = vshrl.u32 %v2139, 7
    %v2141 = vsub.s32 0, %v2140
    %v2142 = vrot.slane %v2122, %v2141
    %v2143 = vlaneseq
    %v2144 = vshrl.u32 %v2143, 7
    %v2145 = vsub.s32 0, %v2144
    %v2146 = vrot.slane %v2126, %v2145
    %v2147 = vlaneseq
    %v2148 = vshrl.u32 %v2147, 7
    %v2149 = vsub.s32 0, %v2148
    %v2150 = vrot.slane %v2130, %v2149
    %v2151 = vmul.f32 %v2107, %v2138
    %v2152 = vmul.f32 %v2108, %v2142
    %v2153 = vmul.f32 %v2109, %v2146
    %v2154 = vmul.f32 %v2110, %v2150
    %v2155 = vadd.f32 %v2151, %v2152
    %v2156 = vadd.f32 %v2155, %v2153
    %v2157 = vadd.f32 %v2156, %v2154
    %2158 = vadd.xlane.f32.xlu0 %v2157
    %v2159 = vpop.xlane.xlu0 %2158
    %v2161 = vlaneseq
    %v2162 = vshrl.u32 %v2161, 7
    %v2163 = vsub.s32 0, %v2162
    %v2164 = vrot.slane %v2111, %v2163
    %v2166 = vadd.f32 %v2159, %v2164
    %vm2167 = vcmask 7168
    %2168 = vst.msk [vmem:[%s9] sm:$0xff] %vm2167, %v2166
    %v2169 = vlaneseq
    %v2170 = vshrl.u32 %v2169, 7
    %v2171 = vsub.s32 1, %v2170
    %v2172 = vrot.slane %v2113, %v2171
    %v2173 = vlaneseq
    %v2174 = vshrl.u32 %v2173, 7
    %v2175 = vsub.s32 3, %v2174
    %v2176 = vrot.slane %v2113, %v2175
    %v2177 = vlaneseq
    %v2178 = vshrl.u32 %v2177, 7
    %v2179 = vsub.s32 5, %v2178
    %v2180 = vrot.slane %v2113, %v2179
    %v2181 = vlaneseq
    %v2182 = vshrl.u32 %v2181, 7
    %v2183 = vsub.s32 7, %v2182
    %v2184 = vrot.slane %v2113, %v2183
    %v2189 = vlaneseq
    %v2190 = vshrl.u32 %v2189, 7
    %v2191 = vsub.s32 1, %v2190
    %v2192 = vrot.slane %v2172, %v2191
    %v2193 = vlaneseq
    %v2194 = vshrl.u32 %v2193, 7
    %v2195 = vsub.s32 1, %v2194
    %v2196 = vrot.slane %v2176, %v2195
    %v2197 = vlaneseq
    %v2198 = vshrl.u32 %v2197, 7
    %v2199 = vsub.s32 1, %v2198
    %v2200 = vrot.slane %v2180, %v2199
    %v2201 = vlaneseq
    %v2202 = vshrl.u32 %v2201, 7
    %v2203 = vsub.s32 1, %v2202
    %v2204 = vrot.slane %v2184, %v2203
    %v2205 = vmul.f32 %v2107, %v2192
    %v2206 = vmul.f32 %v2108, %v2196
    %v2207 = vmul.f32 %v2109, %v2200
    %v2208 = vmul.f32 %v2110, %v2204
    %v2209 = vadd.f32 %v2205, %v2206
    %v2210 = vadd.f32 %v2209, %v2207
    %v2211 = vadd.f32 %v2210, %v2208
    %2212 = vadd.xlane.f32.xlu0 %v2211
    %v2213 = vpop.xlane.xlu0 %2212
    %v2214 = vadd.f32 %v2213, %v2164
    %vm2215 = vcmask 15368
    %2216 = vst.msk [vmem:[%s9] sm:$0xff] %vm2215, %v2214
    // Predicated region
    $region46: #{generator_forward.1} parent=1 // pred_check
      _
    $region47: #{generator_forward.1} parent=1 // pred_check_branch
      %2218 = sbr.rel (0) target = $region49
    $region48: #{generator_forward.1} parent=1 // pred_region
      _
    $region49: #{generator_forward.1} parent=1 // pred_fallthru
      _
    // Predicated region
    $region50: #{generator_forward.1} parent=1 // pred_check
      _
    $region51: #{generator_forward.1} parent=1 // pred_check_branch
      %2220 = sbr.rel (0) target = $region53
    $region52: #{generator_forward.1} parent=1 // pred_region
      _
    $region53: #{generator_forward.1} parent=1 // pred_fallthru
      _
    %2221 = vsyncpa [#allocation3], 1
    %2222 = vsyncpa [#allocation5], 1

</llo_original>
